<compile_context>
chip_gen: v5e
topology: v5e:2x2
jax: 0.10.0
libtpu: 0.0.40
codegen_flags: <defaults>
</compile_context>

<pallas_src>
import functools
import math

import jax
import jax.numpy as jnp
from jax import lax
from jax.experimental import pallas as pl
from jax.experimental.pallas import tpu as pltpu


def _layernorm(x, gamma, beta, eps=1e-5):
    mu = jnp.mean(x, axis=-1, keepdims=True)
    var = jnp.mean((x - mu) * (x - mu), axis=-1, keepdims=True)
    return (x - mu) * lax.rsqrt(var + eps) * gamma + beta


# ---------------------------------------------------------------------------
# Pallas kernel: one full transformer block for a single batch element
# ---------------------------------------------------------------------------
def transformer_block_kernel(
    x_ref,                    # (1, S, E)  f32
    wqkv_ref, bqkv_ref,       # (E, 3E) bf16, (1, 3E) f32  (Q part pre-scaled)
    wo_ref, bo_ref,           # (E, E) bf16, (1, E) f32
    g1_ref, be1_ref,          # (1, E) f32   LayerNorm1
    w1_ref, b1_ref,           # (E, F) bf16, (1, F) f32    FF linear 1
    w2_ref, b2_ref,           # (F, E) bf16, (1, E) f32    FF linear 2
    g2_ref, be2_ref,          # (1, E) f32   LayerNorm2
    o_ref,                    # (1, S, E) f32
    *, num_heads, head_dim,
):
    E = num_heads * head_dim
    x = x_ref[0]                                  # (S, E) f32
    x_bf = x.astype(jnp.bfloat16)

    # ---- fused QKV projection: one MXU pass over x -------------------------
    qkv = jnp.dot(x_bf, wqkv_ref[...], preferred_element_type=jnp.float32)
    qkv = qkv + bqkv_ref[...]                     # (S, 3E) f32
    q = qkv[:, :E]                                # already scaled by 1/sqrt(Dh)
    k = qkv[:, E:2 * E]
    v = qkv[:, 2 * E:]

    # ---- multi-head self-attention -----------------------------------------
    # Per head: scores via dot_general contracting the last dims (no k.T
    # transpose), f32 softmax with an EUP approx reciprocal, then project the
    # head context through its slice of W_o and accumulate (no concatenate).
    w_o = wo_ref[...]                             # (E, E) bf16, hoisted
    acc = None
    for h in range(num_heads):                    # static unrolled loop
        lo = h * head_dim
        hi = lo + head_dim
        qh = q[:, lo:hi].astype(jnp.bfloat16)     # (S, Dh)
        kh = k[:, lo:hi].astype(jnp.bfloat16)
        vh = v[:, lo:hi].astype(jnp.bfloat16)
        s = lax.dot_general(                      # (S, S), contracts Dh
            qh, kh, (((1,), (1,)), ((), ())),
            preferred_element_type=jnp.float32)
        s = s - jnp.max(s, axis=-1, keepdims=True)
        p = jnp.exp(s)
        p = p * pl.reciprocal(jnp.sum(p, axis=-1, keepdims=True), approx=True)
        ctx = jnp.dot(p.astype(jnp.bfloat16), vh,
                      preferred_element_type=jnp.float32)        # (S, Dh)
        part = jnp.dot(ctx.astype(jnp.bfloat16), w_o[lo:hi, :],
                       preferred_element_type=jnp.float32)       # (S, E)
        acc = part if acc is None else acc + part
    attn = acc + bo_ref[...]

    # ---- residual + LayerNorm1 (dropout = identity in eval) ----------------
    h1 = _layernorm(x + attn, g1_ref[...], be1_ref[...])

    # ---- feed-forward MLP ----------------------------------------------------
    ff = jnp.dot(h1.astype(jnp.bfloat16), w1_ref[...],
                 preferred_element_type=jnp.float32) + b1_ref[...]
    ff = jnp.maximum(ff, 0.0)                     # ReLU (dropout = identity)
    ff = jnp.dot(ff.astype(jnp.bfloat16), w2_ref[...],
                 preferred_element_type=jnp.float32) + b2_ref[...]

    # ---- residual + LayerNorm2 ----------------------------------------------
    o_ref[0] = _layernorm(h1 + ff, g2_ref[...], be2_ref[...])


# ---------------------------------------------------------------------------
# Wrapper
# ---------------------------------------------------------------------------
def transformer_block(x, params, num_heads):
    """x: (B, S, E) float32.  params: dict of weights (see init_params)."""
    B, S, E = x.shape
    F = params["w1"].shape[1]
    head_dim = E // num_heads
    scale = 1.0 / math.sqrt(head_dim)

    # Fuse Q|K|V weights/biases; fold the attention scale into the Q slice.
    w_qkv = jnp.concatenate(
        [params["wq"] * scale, params["wk"], params["wv"]], axis=1
    ).astype(jnp.bfloat16)                                    # (E, 3E)
    b_qkv = jnp.concatenate(
        [params["bq"] * scale, params["bk"], params["bv"]], axis=1
    ).astype(jnp.float32)                                     # (1, 3E)

    wo = params["wo"].astype(jnp.bfloat16)
    w1 = params["w1"].astype(jnp.bfloat16)
    w2 = params["w2"].astype(jnp.bfloat16)

    kernel = functools.partial(
        transformer_block_kernel, num_heads=num_heads, head_dim=head_dim
    )

    args = (
        x,
        w_qkv, b_qkv,
        wo, params["bo"],
        params["g1"], params["be1"],
        w1, params["b1"],
        w2, params["b2"],
        params["g2"], params["be2"],
    )

    def const_spec(shape, single_buffer):
        # Block index is (0, 0) for every grid step -> single buffer suffices.
        if single_buffer:
            return pl.BlockSpec(shape, lambda b: (0, 0),
                                pipeline_mode=pl.Buffered(1))
        return pl.BlockSpec(shape, lambda b: (0, 0))

    def run(single_buffer_weights):
        cs = functools.partial(const_spec, single_buffer=single_buffer_weights)
        in_specs = [
            pl.BlockSpec((1, S, E), lambda b: (b, 0, 0)),     # x
            cs((E, 3 * E)), cs((1, 3 * E)),                   # w_qkv, b_qkv
            cs((E, E)), cs((1, E)),                           # wo, bo
            cs((1, E)), cs((1, E)),                           # gamma1, beta1
            cs((E, F)), cs((1, F)),                           # w1, b1
            cs((F, E)), cs((1, E)),                           # w2, b2
            cs((1, E)), cs((1, E)),                           # gamma2, beta2
        ]
        return pl.pallas_call(
            kernel,
            out_shape=jax.ShapeDtypeStruct((B, S, E), jnp.float32),
            grid_spec=pltpu.PrefetchScalarGridSpec(
                num_scalar_prefetch=0,
                grid=(B,),
                in_specs=in_specs,
                out_specs=pl.BlockSpec((1, S, E), lambda b: (b, 0, 0)),
            ),
            compiler_params=pltpu.CompilerParams(
                dimension_semantics=("parallel",),
                vmem_limit_bytes=64 << 20,
            ),
        )(*args)

    try:
        return run(True)
    except Exception:
        # Fallback for Pallas builds without BlockSpec(pipeline_mode=...).
        return run(False)


# ---------------------------------------------------------------------------
# Deterministic parameter init (matches the PyTorch module's shapes)
# ---------------------------------------------------------------------------
def init_params(key, embed_dim, ff_dim):
    E, F = embed_dim, ff_dim
    ks = jax.random.split(key, 8)
    s = 0.05
    # nn.MultiheadAttention: in_proj_weight (3E, E) split into q/k/v, out_proj.
    # Stored here already transposed so the kernel computes x @ W.
    wq = jax.random.normal(ks[0], (E, E), jnp.float32) * s
    wk = jax.random.normal(ks[1], (E, E), jnp.float32) * s
    wv = jax.random.normal(ks[2], (E, E), jnp.float32) * s
    wo = jax.random.normal(ks[3], (E, E), jnp.float32) * s
    w1 = jax.random.normal(ks[4], (E, F), jnp.float32) * s
    w2 = jax.random.normal(ks[5], (F, E), jnp.float32) * s
    b1 = jax.random.normal(ks[6], (1, F), jnp.float32) * s
    b2 = jax.random.normal(ks[7], (1, E), jnp.float32) * s
    zeros_e = jnp.zeros((1, E), jnp.float32)
    return dict(
        wq=wq, wk=wk, wv=wv,
        bq=zeros_e, bk=zeros_e, bv=zeros_e,
        wo=wo, bo=zeros_e,
        g1=jnp.ones((1, E), jnp.float32), be1=jnp.zeros((1, E), jnp.float32),
        w1=w1, b1=b1, w2=w2, b2=b2,
        g2=jnp.ones((1, E), jnp.float32), be2=jnp.zeros((1, E), jnp.float32),
    )


# ---------------------------------------------------------------------------
# Pure-JAX f32 reference (same math) for a correctness check
# ---------------------------------------------------------------------------
def ref_forward(x, params, num_heads):
    B, S, E = x.shape
    Dh = E // num_heads

    def ln(v, g, b, eps=1e-5):
        mu = jnp.mean(v, -1, keepdims=True)
        var = jnp.mean((v - mu) ** 2, -1, keepdims=True)
        return (v - mu) / jnp.sqrt(var + eps) * g + b

    q = x @ params["wq"] + params["bq"]
    k = x @ params["wk"] + params["bk"]
    v = x @ params["wv"] + params["bv"]
    q = q.reshape(B, S, num_heads, Dh).transpose(0, 2, 1, 3)
    k = k.reshape(B, S, num_heads, Dh).transpose(0, 2, 1, 3)
    v = v.reshape(B, S, num_heads, Dh).transpose(0, 2, 1, 3)
    s = jnp.einsum("bhqd,bhkd->bhqk", q, k) / math.sqrt(Dh)
    p = jax.nn.softmax(s, axis=-1)
    attn = jnp.einsum("bhqk,bhkd->bhqd", p, v).transpose(0, 2, 1, 3).reshape(B, S, E)
    attn = attn @ params["wo"] + params["bo"]
    h1 = ln(x + attn, params["g1"], params["be1"])
    ff = jnp.maximum(h1 @ params["w1"] + params["b1"], 0.0) @ params["w2"] + params["b2"]
    return ln(h1 + ff, params["g2"], params["be2"])


if __name__ == "__main__":
    B, S, E, H, F = 2, 8, 32, 4, 64
    key = jax.random.PRNGKey(0)
    kx, kp = jax.random.split(key)
    x = jax.random.normal(kx, (B, S, E), jnp.float32)
    params = init_params(kp, E, F)

    out = transformer_block(x, params, num_heads=H)
    out = jax.block_until_ready(out)

    ref = ref_forward(x, params, num_heads=H)
    assert out.shape == (B, S, E)
    # bf16 matmul operands + approx reciprocal -> slightly looser tolerance.
    assert jnp.allclose(out, ref, rtol=2e-2, atol=2e-2), (
        f"max abs err {jnp.max(jnp.abs(out - ref))}"
    )
    print("KERNEL_OK")
</pallas_src>

<mosaic_0001>
module attributes {stable_mosaic.version = 11 : i64} {
  func.func @transformer_block_kernel(%arg0: i32, %arg1: memref<1x8x32xf32, #tpu.memory_space<vmem>>, %arg2: memref<32x96xbf16, #tpu.memory_space<vmem>>, %arg3: memref<1x96xf32, #tpu.memory_space<vmem>>, %arg4: memref<32x32xbf16, #tpu.memory_space<vmem>>, %arg5: memref<1x32xf32, #tpu.memory_space<vmem>>, %arg6: memref<1x32xf32, #tpu.memory_space<vmem>>, %arg7: memref<1x32xf32, #tpu.memory_space<vmem>>, %arg8: memref<32x64xbf16, #tpu.memory_space<vmem>>, %arg9: memref<1x64xf32, #tpu.memory_space<vmem>>, %arg10: memref<64x32xbf16, #tpu.memory_space<vmem>>, %arg11: memref<1x32xf32, #tpu.memory_space<vmem>>, %arg12: memref<1x32xf32, #tpu.memory_space<vmem>>, %arg13: memref<1x32xf32, #tpu.memory_space<vmem>>, %arg14: memref<1x8x32xf32, #tpu.memory_space<vmem>>) attributes {dimension_semantics = [#tpu.dimension_semantics<parallel>], iteration_bounds = array<i64: 2>, scalar_prefetch = 0 : i64, scratch_operands = 0 : i64, tpu.core_type = #tpu.core_type<tc>, window_params = [{transform_indices = @transform_0, window_bounds = array<i64: 1, 8, 32>}, {pipeline_mode = #tpu.pipeline_mode<synchronous>, transform_indices = @transform_1, window_bounds = array<i64: 32, 96>}, {pipeline_mode = #tpu.pipeline_mode<synchronous>, transform_indices = @transform_2, window_bounds = array<i64: 1, 96>}, {pipeline_mode = #tpu.pipeline_mode<synchronous>, transform_indices = @transform_3, window_bounds = array<i64: 32, 32>}, {pipeline_mode = #tpu.pipeline_mode<synchronous>, transform_indices = @transform_4, window_bounds = array<i64: 1, 32>}, {pipeline_mode = #tpu.pipeline_mode<synchronous>, transform_indices = @transform_5, window_bounds = array<i64: 1, 32>}, {pipeline_mode = #tpu.pipeline_mode<synchronous>, transform_indices = @transform_6, window_bounds = array<i64: 1, 32>}, {pipeline_mode = #tpu.pipeline_mode<synchronous>, transform_indices = @transform_7, window_bounds = array<i64: 32, 64>}, {pipeline_mode = #tpu.pipeline_mode<synchronous>, transform_indices = @transform_8, window_bounds = array<i64: 1, 64>}, {pipeline_mode = #tpu.pipeline_mode<synchronous>, transform_indices = @transform_9, window_bounds = array<i64: 64, 32>}, {pipeline_mode = #tpu.pipeline_mode<synchronous>, transform_indices = @transform_10, window_bounds = array<i64: 1, 32>}, {pipeline_mode = #tpu.pipeline_mode<synchronous>, transform_indices = @transform_11, window_bounds = array<i64: 1, 32>}, {pipeline_mode = #tpu.pipeline_mode<synchronous>, transform_indices = @transform_12, window_bounds = array<i64: 1, 32>}, {transform_indices = @transform_13, window_bounds = array<i64: 1, 8, 32>}]} {
    %c0 = arith.constant 0 : index
    %c0_0 = arith.constant 0 : index
    %c0_1 = arith.constant 0 : index
    %0 = vector.load %arg1[%c0, %c0_0, %c0_1] : memref<1x8x32xf32, #tpu.memory_space<vmem>>, vector<1x8x32xf32>
    %1 = vector.shape_cast %0 : vector<1x8x32xf32> to vector<8x32xf32>
    %2 = arith.truncf %1 : vector<8x32xf32> to vector<8x32xbf16>
    %c0_2 = arith.constant 0 : index
    %c0_3 = arith.constant 0 : index
    %3 = vector.load %arg2[%c0_2, %c0_3] : memref<32x96xbf16, #tpu.memory_space<vmem>>, vector<32x96xbf16>
    %cst = arith.constant dense<0.000000e+00> : vector<8x96xf32>
    %4 = tpu.matmul %2, %3, %cst {dimension_numbers = #tpu.dot_dimension_numbers<[1], [0], [0], [1], [0, 0, 1, 1], [], []>} : vector<8x32xbf16>, vector<32x96xbf16>, vector<8x96xf32> -> vector<8x96xf32>
    %c0_4 = arith.constant 0 : index
    %c0_5 = arith.constant 0 : index
    %5 = vector.load %arg3[%c0_4, %c0_5] : memref<1x96xf32, #tpu.memory_space<vmem>>, vector<1x96xf32>
    %6 = vector.broadcast %5 : vector<1x96xf32> to vector<8x96xf32>
    %7 = arith.addf %4, %6 : vector<8x96xf32>
    %8 = vector.extract_strided_slice %7 {offsets = [0, 0], sizes = [8, 32], strides = [1, 1]} : vector<8x96xf32> to vector<8x32xf32>
    %9 = vector.extract_strided_slice %7 {offsets = [0, 32], sizes = [8, 32], strides = [1, 1]} : vector<8x96xf32> to vector<8x32xf32>
    %10 = vector.extract_strided_slice %7 {offsets = [0, 64], sizes = [8, 32], strides = [1, 1]} : vector<8x96xf32> to vector<8x32xf32>
    %c0_6 = arith.constant 0 : index
    %c0_7 = arith.constant 0 : index
    %11 = vector.load %arg4[%c0_6, %c0_7] : memref<32x32xbf16, #tpu.memory_space<vmem>>, vector<32x32xbf16>
    %12 = vector.extract_strided_slice %8 {offsets = [0, 0], sizes = [8, 8], strides = [1, 1]} : vector<8x32xf32> to vector<8x8xf32>
    %13 = arith.truncf %12 : vector<8x8xf32> to vector<8x8xbf16>
    %14 = vector.extract_strided_slice %9 {offsets = [0, 0], sizes = [8, 8], strides = [1, 1]} : vector<8x32xf32> to vector<8x8xf32>
    %15 = arith.truncf %14 : vector<8x8xf32> to vector<8x8xbf16>
    %16 = vector.extract_strided_slice %10 {offsets = [0, 0], sizes = [8, 8], strides = [1, 1]} : vector<8x32xf32> to vector<8x8xf32>
    %17 = arith.truncf %16 : vector<8x8xf32> to vector<8x8xbf16>
    %cst_8 = arith.constant dense<0.000000e+00> : vector<8x8xf32>
    %18 = tpu.matmul %13, %15, %cst_8 {dimension_numbers = #tpu.dot_dimension_numbers<[1], [1], [0], [0], [0, 0, 1, 0], [], []>} : vector<8x8xbf16>, vector<8x8xbf16>, vector<8x8xf32> -> vector<8x8xf32>
    %cst_9 = arith.constant dense<0xFF800000> : vector<8xf32>
    %19 = vector.multi_reduction <maximumf>, %18, %cst_9 [1] : vector<8x8xf32> to vector<8xf32>
    %20 = vector.shape_cast %19 : vector<8xf32> to vector<8x1xf32>
    %21 = vector.broadcast %20 : vector<8x1xf32> to vector<8x8xf32>
    %22 = arith.subf %18, %21 : vector<8x8xf32>
    %23 = math.exp %22 : vector<8x8xf32>
    %cst_10 = arith.constant dense<0.000000e+00> : vector<8xf32>
    %24 = vector.multi_reduction <add>, %23, %cst_10 [1] : vector<8x8xf32> to vector<8xf32>
    %25 = vector.shape_cast %24 : vector<8xf32> to vector<8x1xf32>
    %26 = tpu.reciprocal %25 {approx = true} : vector<8x1xf32> -> vector<8x1xf32>
    %27 = vector.broadcast %26 : vector<8x1xf32> to vector<8x8xf32>
    %28 = arith.mulf %23, %27 : vector<8x8xf32>
    %29 = arith.truncf %28 : vector<8x8xf32> to vector<8x8xbf16>
    %cst_11 = arith.constant dense<0.000000e+00> : vector<8x8xf32>
    %30 = tpu.matmul %29, %17, %cst_11 {dimension_numbers = #tpu.dot_dimension_numbers<[1], [0], [0], [1], [0, 0, 1, 1], [], []>} : vector<8x8xbf16>, vector<8x8xbf16>, vector<8x8xf32> -> vector<8x8xf32>
    %31 = arith.truncf %30 : vector<8x8xf32> to vector<8x8xbf16>
    %32 = vector.extract_strided_slice %11 {offsets = [0, 0], sizes = [8, 32], strides = [1, 1]} : vector<32x32xbf16> to vector<8x32xbf16>
    %cst_12 = arith.constant dense<0.000000e+00> : vector<8x32xf32>
    %33 = tpu.matmul %31, %32, %cst_12 {dimension_numbers = #tpu.dot_dimension_numbers<[1], [0], [0], [1], [0, 0, 1, 1], [], []>} : vector<8x8xbf16>, vector<8x32xbf16>, vector<8x32xf32> -> vector<8x32xf32>
    %34 = vector.extract_strided_slice %8 {offsets = [0, 8], sizes = [8, 8], strides = [1, 1]} : vector<8x32xf32> to vector<8x8xf32>
    %35 = arith.truncf %34 : vector<8x8xf32> to vector<8x8xbf16>
    %36 = vector.extract_strided_slice %9 {offsets = [0, 8], sizes = [8, 8], strides = [1, 1]} : vector<8x32xf32> to vector<8x8xf32>
    %37 = arith.truncf %36 : vector<8x8xf32> to vector<8x8xbf16>
    %38 = vector.extract_strided_slice %10 {offsets = [0, 8], sizes = [8, 8], strides = [1, 1]} : vector<8x32xf32> to vector<8x8xf32>
    %39 = arith.truncf %38 : vector<8x8xf32> to vector<8x8xbf16>
    %cst_13 = arith.constant dense<0.000000e+00> : vector<8x8xf32>
    %40 = tpu.matmul %35, %37, %cst_13 {dimension_numbers = #tpu.dot_dimension_numbers<[1], [1], [0], [0], [0, 0, 1, 0], [], []>} : vector<8x8xbf16>, vector<8x8xbf16>, vector<8x8xf32> -> vector<8x8xf32>
    %cst_14 = arith.constant dense<0xFF800000> : vector<8xf32>
    %41 = vector.multi_reduction <maximumf>, %40, %cst_14 [1] : vector<8x8xf32> to vector<8xf32>
    %42 = vector.shape_cast %41 : vector<8xf32> to vector<8x1xf32>
    %43 = vector.broadcast %42 : vector<8x1xf32> to vector<8x8xf32>
    %44 = arith.subf %40, %43 : vector<8x8xf32>
    %45 = math.exp %44 : vector<8x8xf32>
    %cst_15 = arith.constant dense<0.000000e+00> : vector<8xf32>
    %46 = vector.multi_reduction <add>, %45, %cst_15 [1] : vector<8x8xf32> to vector<8xf32>
    %47 = vector.shape_cast %46 : vector<8xf32> to vector<8x1xf32>
    %48 = tpu.reciprocal %47 {approx = true} : vector<8x1xf32> -> vector<8x1xf32>
    %49 = vector.broadcast %48 : vector<8x1xf32> to vector<8x8xf32>
    %50 = arith.mulf %45, %49 : vector<8x8xf32>
    %51 = arith.truncf %50 : vector<8x8xf32> to vector<8x8xbf16>
    %cst_16 = arith.constant dense<0.000000e+00> : vector<8x8xf32>
    %52 = tpu.matmul %51, %39, %cst_16 {dimension_numbers = #tpu.dot_dimension_numbers<[1], [0], [0], [1], [0, 0, 1, 1], [], []>} : vector<8x8xbf16>, vector<8x8xbf16>, vector<8x8xf32> -> vector<8x8xf32>
    %53 = arith.truncf %52 : vector<8x8xf32> to vector<8x8xbf16>
    %54 = vector.extract_strided_slice %11 {offsets = [8, 0], sizes = [8, 32], strides = [1, 1]} : vector<32x32xbf16> to vector<8x32xbf16>
    %cst_17 = arith.constant dense<0.000000e+00> : vector<8x32xf32>
    %55 = tpu.matmul %53, %54, %cst_17 {dimension_numbers = #tpu.dot_dimension_numbers<[1], [0], [0], [1], [0, 0, 1, 1], [], []>} : vector<8x8xbf16>, vector<8x32xbf16>, vector<8x32xf32> -> vector<8x32xf32>
    %56 = arith.addf %33, %55 : vector<8x32xf32>
    %57 = vector.extract_strided_slice %8 {offsets = [0, 16], sizes = [8, 8], strides = [1, 1]} : vector<8x32xf32> to vector<8x8xf32>
    %58 = arith.truncf %57 : vector<8x8xf32> to vector<8x8xbf16>
    %59 = vector.extract_strided_slice %9 {offsets = [0, 16], sizes = [8, 8], strides = [1, 1]} : vector<8x32xf32> to vector<8x8xf32>
    %60 = arith.truncf %59 : vector<8x8xf32> to vector<8x8xbf16>
    %61 = vector.extract_strided_slice %10 {offsets = [0, 16], sizes = [8, 8], strides = [1, 1]} : vector<8x32xf32> to vector<8x8xf32>
    %62 = arith.truncf %61 : vector<8x8xf32> to vector<8x8xbf16>
    %cst_18 = arith.constant dense<0.000000e+00> : vector<8x8xf32>
    %63 = tpu.matmul %58, %60, %cst_18 {dimension_numbers = #tpu.dot_dimension_numbers<[1], [1], [0], [0], [0, 0, 1, 0], [], []>} : vector<8x8xbf16>, vector<8x8xbf16>, vector<8x8xf32> -> vector<8x8xf32>
    %cst_19 = arith.constant dense<0xFF800000> : vector<8xf32>
    %64 = vector.multi_reduction <maximumf>, %63, %cst_19 [1] : vector<8x8xf32> to vector<8xf32>
    %65 = vector.shape_cast %64 : vector<8xf32> to vector<8x1xf32>
    %66 = vector.broadcast %65 : vector<8x1xf32> to vector<8x8xf32>
    %67 = arith.subf %63, %66 : vector<8x8xf32>
    %68 = math.exp %67 : vector<8x8xf32>
    %cst_20 = arith.constant dense<0.000000e+00> : vector<8xf32>
    %69 = vector.multi_reduction <add>, %68, %cst_20 [1] : vector<8x8xf32> to vector<8xf32>
    %70 = vector.shape_cast %69 : vector<8xf32> to vector<8x1xf32>
    %71 = tpu.reciprocal %70 {approx = true} : vector<8x1xf32> -> vector<8x1xf32>
    %72 = vector.broadcast %71 : vector<8x1xf32> to vector<8x8xf32>
    %73 = arith.mulf %68, %72 : vector<8x8xf32>
    %74 = arith.truncf %73 : vector<8x8xf32> to vector<8x8xbf16>
    %cst_21 = arith.constant dense<0.000000e+00> : vector<8x8xf32>
    %75 = tpu.matmul %74, %62, %cst_21 {dimension_numbers = #tpu.dot_dimension_numbers<[1], [0], [0], [1], [0, 0, 1, 1], [], []>} : vector<8x8xbf16>, vector<8x8xbf16>, vector<8x8xf32> -> vector<8x8xf32>
    %76 = arith.truncf %75 : vector<8x8xf32> to vector<8x8xbf16>
    %77 = vector.extract_strided_slice %11 {offsets = [16, 0], sizes = [8, 32], strides = [1, 1]} : vector<32x32xbf16> to vector<8x32xbf16>
    %cst_22 = arith.constant dense<0.000000e+00> : vector<8x32xf32>
    %78 = tpu.matmul %76, %77, %cst_22 {dimension_numbers = #tpu.dot_dimension_numbers<[1], [0], [0], [1], [0, 0, 1, 1], [], []>} : vector<8x8xbf16>, vector<8x32xbf16>, vector<8x32xf32> -> vector<8x32xf32>
    %79 = arith.addf %56, %78 : vector<8x32xf32>
    %80 = vector.extract_strided_slice %8 {offsets = [0, 24], sizes = [8, 8], strides = [1, 1]} : vector<8x32xf32> to vector<8x8xf32>
    %81 = arith.truncf %80 : vector<8x8xf32> to vector<8x8xbf16>
    %82 = vector.extract_strided_slice %9 {offsets = [0, 24], sizes = [8, 8], strides = [1, 1]} : vector<8x32xf32> to vector<8x8xf32>
    %83 = arith.truncf %82 : vector<8x8xf32> to vector<8x8xbf16>
    %84 = vector.extract_strided_slice %10 {offsets = [0, 24], sizes = [8, 8], strides = [1, 1]} : vector<8x32xf32> to vector<8x8xf32>
    %85 = arith.truncf %84 : vector<8x8xf32> to vector<8x8xbf16>
    %cst_23 = arith.constant dense<0.000000e+00> : vector<8x8xf32>
    %86 = tpu.matmul %81, %83, %cst_23 {dimension_numbers = #tpu.dot_dimension_numbers<[1], [1], [0], [0], [0, 0, 1, 0], [], []>} : vector<8x8xbf16>, vector<8x8xbf16>, vector<8x8xf32> -> vector<8x8xf32>
    %cst_24 = arith.constant dense<0xFF800000> : vector<8xf32>
    %87 = vector.multi_reduction <maximumf>, %86, %cst_24 [1] : vector<8x8xf32> to vector<8xf32>
    %88 = vector.shape_cast %87 : vector<8xf32> to vector<8x1xf32>
    %89 = vector.broadcast %88 : vector<8x1xf32> to vector<8x8xf32>
    %90 = arith.subf %86, %89 : vector<8x8xf32>
    %91 = math.exp %90 : vector<8x8xf32>
    %cst_25 = arith.constant dense<0.000000e+00> : vector<8xf32>
    %92 = vector.multi_reduction <add>, %91, %cst_25 [1] : vector<8x8xf32> to vector<8xf32>
    %93 = vector.shape_cast %92 : vector<8xf32> to vector<8x1xf32>
    %94 = tpu.reciprocal %93 {approx = true} : vector<8x1xf32> -> vector<8x1xf32>
    %95 = vector.broadcast %94 : vector<8x1xf32> to vector<8x8xf32>
    %96 = arith.mulf %91, %95 : vector<8x8xf32>
    %97 = arith.truncf %96 : vector<8x8xf32> to vector<8x8xbf16>
    %cst_26 = arith.constant dense<0.000000e+00> : vector<8x8xf32>
    %98 = tpu.matmul %97, %85, %cst_26 {dimension_numbers = #tpu.dot_dimension_numbers<[1], [0], [0], [1], [0, 0, 1, 1], [], []>} : vector<8x8xbf16>, vector<8x8xbf16>, vector<8x8xf32> -> vector<8x8xf32>
    %99 = arith.truncf %98 : vector<8x8xf32> to vector<8x8xbf16>
    %100 = vector.extract_strided_slice %11 {offsets = [24, 0], sizes = [8, 32], strides = [1, 1]} : vector<32x32xbf16> to vector<8x32xbf16>
    %cst_27 = arith.constant dense<0.000000e+00> : vector<8x32xf32>
    %101 = tpu.matmul %99, %100, %cst_27 {dimension_numbers = #tpu.dot_dimension_numbers<[1], [0], [0], [1], [0, 0, 1, 1], [], []>} : vector<8x8xbf16>, vector<8x32xbf16>, vector<8x32xf32> -> vector<8x32xf32>
    %102 = arith.addf %79, %101 : vector<8x32xf32>
    %c0_28 = arith.constant 0 : index
    %c0_29 = arith.constant 0 : index
    %103 = vector.load %arg5[%c0_28, %c0_29] : memref<1x32xf32, #tpu.memory_space<vmem>>, vector<1x32xf32>
    %104 = vector.broadcast %103 : vector<1x32xf32> to vector<8x32xf32>
    %105 = arith.addf %102, %104 : vector<8x32xf32>
    %106 = arith.addf %1, %105 : vector<8x32xf32>
    %c0_30 = arith.constant 0 : index
    %c0_31 = arith.constant 0 : index
    %107 = vector.load %arg6[%c0_30, %c0_31] : memref<1x32xf32, #tpu.memory_space<vmem>>, vector<1x32xf32>
    %c0_32 = arith.constant 0 : index
    %c0_33 = arith.constant 0 : index
    %108 = vector.load %arg7[%c0_32, %c0_33] : memref<1x32xf32, #tpu.memory_space<vmem>>, vector<1x32xf32>
    %cst_34 = arith.constant dense<0.000000e+00> : vector<8xf32>
    %109 = vector.multi_reduction <add>, %106, %cst_34 [1] : vector<8x32xf32> to vector<8xf32>
    %110 = vector.shape_cast %109 : vector<8xf32> to vector<8x1xf32>
    %cst_35 = arith.constant 3.200000e+01 : f32
    %111 = vector.broadcast %cst_35 : f32 to vector<8x1xf32>
    %112 = arith.divf %110, %111 : vector<8x1xf32>
    %113 = vector.broadcast %112 : vector<8x1xf32> to vector<8x32xf32>
    %114 = arith.subf %106, %113 : vector<8x32xf32>
    %115 = vector.broadcast %112 : vector<8x1xf32> to vector<8x32xf32>
    %116 = arith.subf %106, %115 : vector<8x32xf32>
    %117 = arith.mulf %114, %116 : vector<8x32xf32>
    %cst_36 = arith.constant dense<0.000000e+00> : vector<8xf32>
    %118 = vector.multi_reduction <add>, %117, %cst_36 [1] : vector<8x32xf32> to vector<8xf32>
    %119 = vector.shape_cast %118 : vector<8xf32> to vector<8x1xf32>
    %cst_37 = arith.constant 3.200000e+01 : f32
    %120 = vector.broadcast %cst_37 : f32 to vector<8x1xf32>
    %121 = arith.divf %119, %120 : vector<8x1xf32>
    %122 = vector.broadcast %112 : vector<8x1xf32> to vector<8x32xf32>
    %123 = arith.subf %106, %122 : vector<8x32xf32>
    %cst_38 = arith.constant 9.99999974E-6 : f32
    %124 = vector.broadcast %cst_38 : f32 to vector<8x1xf32>
    %125 = arith.addf %121, %124 : vector<8x1xf32>
    %126 = math.rsqrt %125 : vector<8x1xf32>
    %127 = vector.broadcast %126 : vector<8x1xf32> to vector<8x32xf32>
    %128 = arith.mulf %123, %127 : vector<8x32xf32>
    %129 = vector.broadcast %107 : vector<1x32xf32> to vector<8x32xf32>
    %130 = arith.mulf %128, %129 : vector<8x32xf32>
    %131 = vector.broadcast %108 : vector<1x32xf32> to vector<8x32xf32>
    %132 = arith.addf %130, %131 : vector<8x32xf32>
    %133 = arith.truncf %132 : vector<8x32xf32> to vector<8x32xbf16>
    %c0_39 = arith.constant 0 : index
    %c0_40 = arith.constant 0 : index
    %134 = vector.load %arg8[%c0_39, %c0_40] : memref<32x64xbf16, #tpu.memory_space<vmem>>, vector<32x64xbf16>
    %cst_41 = arith.constant dense<0.000000e+00> : vector<8x64xf32>
    %135 = tpu.matmul %133, %134, %cst_41 {dimension_numbers = #tpu.dot_dimension_numbers<[1], [0], [0], [1], [0, 0, 1, 1], [], []>} : vector<8x32xbf16>, vector<32x64xbf16>, vector<8x64xf32> -> vector<8x64xf32>
    %c0_42 = arith.constant 0 : index
    %c0_43 = arith.constant 0 : index
    %136 = vector.load %arg9[%c0_42, %c0_43] : memref<1x64xf32, #tpu.memory_space<vmem>>, vector<1x64xf32>
    %137 = vector.broadcast %136 : vector<1x64xf32> to vector<8x64xf32>
    %138 = arith.addf %135, %137 : vector<8x64xf32>
    %cst_44 = arith.constant 0.000000e+00 : f32
    %139 = vector.broadcast %cst_44 : f32 to vector<8x64xf32>
    %140 = arith.maximumf %138, %139 : vector<8x64xf32>
    %141 = arith.truncf %140 : vector<8x64xf32> to vector<8x64xbf16>
    %c0_45 = arith.constant 0 : index
    %c0_46 = arith.constant 0 : index
    %142 = vector.load %arg10[%c0_45, %c0_46] : memref<64x32xbf16, #tpu.memory_space<vmem>>, vector<64x32xbf16>
    %cst_47 = arith.constant dense<0.000000e+00> : vector<8x32xf32>
    %143 = tpu.matmul %141, %142, %cst_47 {dimension_numbers = #tpu.dot_dimension_numbers<[1], [0], [0], [1], [0, 0, 1, 1], [], []>} : vector<8x64xbf16>, vector<64x32xbf16>, vector<8x32xf32> -> vector<8x32xf32>
    %c0_48 = arith.constant 0 : index
    %c0_49 = arith.constant 0 : index
    %144 = vector.load %arg11[%c0_48, %c0_49] : memref<1x32xf32, #tpu.memory_space<vmem>>, vector<1x32xf32>
    %145 = vector.broadcast %144 : vector<1x32xf32> to vector<8x32xf32>
    %146 = arith.addf %143, %145 : vector<8x32xf32>
    %147 = arith.addf %132, %146 : vector<8x32xf32>
    %c0_50 = arith.constant 0 : index
    %c0_51 = arith.constant 0 : index
    %148 = vector.load %arg12[%c0_50, %c0_51] : memref<1x32xf32, #tpu.memory_space<vmem>>, vector<1x32xf32>
    %c0_52 = arith.constant 0 : index
    %c0_53 = arith.constant 0 : index
    %149 = vector.load %arg13[%c0_52, %c0_53] : memref<1x32xf32, #tpu.memory_space<vmem>>, vector<1x32xf32>
    %cst_54 = arith.constant dense<0.000000e+00> : vector<8xf32>
    %150 = vector.multi_reduction <add>, %147, %cst_54 [1] : vector<8x32xf32> to vector<8xf32>
    %151 = vector.shape_cast %150 : vector<8xf32> to vector<8x1xf32>
    %cst_55 = arith.constant 3.200000e+01 : f32
    %152 = vector.broadcast %cst_55 : f32 to vector<8x1xf32>
    %153 = arith.divf %151, %152 : vector<8x1xf32>
    %154 = vector.broadcast %153 : vector<8x1xf32> to vector<8x32xf32>
    %155 = arith.subf %147, %154 : vector<8x32xf32>
    %156 = vector.broadcast %153 : vector<8x1xf32> to vector<8x32xf32>
    %157 = arith.subf %147, %156 : vector<8x32xf32>
    %158 = arith.mulf %155, %157 : vector<8x32xf32>
    %cst_56 = arith.constant dense<0.000000e+00> : vector<8xf32>
    %159 = vector.multi_reduction <add>, %158, %cst_56 [1] : vector<8x32xf32> to vector<8xf32>
    %160 = vector.shape_cast %159 : vector<8xf32> to vector<8x1xf32>
    %cst_57 = arith.constant 3.200000e+01 : f32
    %161 = vector.broadcast %cst_57 : f32 to vector<8x1xf32>
    %162 = arith.divf %160, %161 : vector<8x1xf32>
    %163 = vector.broadcast %153 : vector<8x1xf32> to vector<8x32xf32>
    %164 = arith.subf %147, %163 : vector<8x32xf32>
    %cst_58 = arith.constant 9.99999974E-6 : f32
    %165 = vector.broadcast %cst_58 : f32 to vector<8x1xf32>
    %166 = arith.addf %162, %165 : vector<8x1xf32>
    %167 = math.rsqrt %166 : vector<8x1xf32>
    %168 = vector.broadcast %167 : vector<8x1xf32> to vector<8x32xf32>
    %169 = arith.mulf %164, %168 : vector<8x32xf32>
    %170 = vector.broadcast %148 : vector<1x32xf32> to vector<8x32xf32>
    %171 = arith.mulf %169, %170 : vector<8x32xf32>
    %172 = vector.broadcast %149 : vector<1x32xf32> to vector<8x32xf32>
    %173 = arith.addf %171, %172 : vector<8x32xf32>
    %c0_59 = arith.constant 0 : index
    %c0_60 = arith.constant 0 : index
    %c0_61 = arith.constant 0 : index
    %174 = vector.load %arg14[%c0_59, %c0_60, %c0_61] : memref<1x8x32xf32, #tpu.memory_space<vmem>>, vector<1x8x32xf32>
    %175 = vector.shape_cast %174 : vector<1x8x32xf32> to vector<8x32xf32>
    %176 = vector.shape_cast %173 : vector<8x32xf32> to vector<1x8x32xf32>
    tpu.vector_store %arg14[%c0_59, %c0_60, %c0_61], %176 {strides = array<i32>} : memref<1x8x32xf32, #tpu.memory_space<vmem>>, vector<1x8x32xf32>,
    return
  }
  func.func @transform_0(%arg0: i32) -> (i32, i32, i32) {
    %c0_i32 = arith.constant 0 : i32
    %c0_i32_0 = arith.constant 0 : i32
    %c0_i32_1 = arith.constant 0 : i32
    return %arg0, %c0_i32, %c0_i32_0 : i32, i32, i32
  }
  func.func @transform_1(%arg0: i32) -> (i32, i32) {
    %c0_i32 = arith.constant 0 : i32
    %c0_i32_0 = arith.constant 0 : i32
    %c0_i32_1 = arith.constant 0 : i32
    return %c0_i32, %c0_i32_0 : i32, i32
  }
  func.func @transform_2(%arg0: i32) -> (i32, i32) {
    %c0_i32 = arith.constant 0 : i32
    %c0_i32_0 = arith.constant 0 : i32
    %c0_i32_1 = arith.constant 0 : i32
    return %c0_i32, %c0_i32_0 : i32, i32
  }
  func.func @transform_3(%arg0: i32) -> (i32, i32) {
    %c0_i32 = arith.constant 0 : i32
    %c0_i32_0 = arith.constant 0 : i32
    %c0_i32_1 = arith.constant 0 : i32
    return %c0_i32, %c0_i32_0 : i32, i32
  }
  func.func @transform_4(%arg0: i32) -> (i32, i32) {
    %c0_i32 = arith.constant 0 : i32
    %c0_i32_0 = arith.constant 0 : i32
    %c0_i32_1 = arith.constant 0 : i32
    return %c0_i32, %c0_i32_0 : i32, i32
  }
  func.func @transform_5(%arg0: i32) -> (i32, i32) {
    %c0_i32 = arith.constant 0 : i32
    %c0_i32_0 = arith.constant 0 : i32
    %c0_i32_1 = arith.constant 0 : i32
    return %c0_i32, %c0_i32_0 : i32, i32
  }
  func.func @transform_6(%arg0: i32) -> (i32, i32) {
    %c0_i32 = arith.constant 0 : i32
    %c0_i32_0 = arith.constant 0 : i32
    %c0_i32_1 = arith.constant 0 : i32
    return %c0_i32, %c0_i32_0 : i32, i32
  }
  func.func @transform_7(%arg0: i32) -> (i32, i32) {
    %c0_i32 = arith.constant 0 : i32
    %c0_i32_0 = arith.constant 0 : i32
    %c0_i32_1 = arith.constant 0 : i32
    return %c0_i32, %c0_i32_0 : i32, i32
  }
  func.func @transform_8(%arg0: i32) -> (i32, i32) {
    %c0_i32 = arith.constant 0 : i32
    %c0_i32_0 = arith.constant 0 : i32
    %c0_i32_1 = arith.constant 0 : i32
    return %c0_i32, %c0_i32_0 : i32, i32
  }
  func.func @transform_9(%arg0: i32) -> (i32, i32) {
    %c0_i32 = arith.constant 0 : i32
    %c0_i32_0 = arith.constant 0 : i32
    %c0_i32_1 = arith.constant 0 : i32
    return %c0_i32, %c0_i32_0 : i32, i32
  }
  func.func @transform_10(%arg0: i32) -> (i32, i32) {
    %c0_i32 = arith.constant 0 : i32
    %c0_i32_0 = arith.constant 0 : i32
    %c0_i32_1 = arith.constant 0 : i32
    return %c0_i32, %c0_i32_0 : i32, i32
  }
  func.func @transform_11(%arg0: i32) -> (i32, i32) {
    %c0_i32 = arith.constant 0 : i32
    %c0_i32_0 = arith.constant 0 : i32
    %c0_i32_1 = arith.constant 0 : i32
    return %c0_i32, %c0_i32_0 : i32, i32
  }
  func.func @transform_12(%arg0: i32) -> (i32, i32) {
    %c0_i32 = arith.constant 0 : i32
    %c0_i32_0 = arith.constant 0 : i32
    %c0_i32_1 = arith.constant 0 : i32
    return %c0_i32, %c0_i32_0 : i32, i32
  }
  func.func @transform_13(%arg0: i32) -> (i32, i32, i32) {
    %c0_i32 = arith.constant 0 : i32
    %c0_i32_0 = arith.constant 0 : i32
    %c0_i32_1 = arith.constant 0 : i32
    return %arg0, %c0_i32, %c0_i32_0 : i32, i32, i32
  }
}

module attributes {stable_mosaic.version = 11 : i64} {
  func.func @transformer_block_kernel(%arg0: i32, %arg1: memref<1x8x32xf32, #tpu.memory_space<vmem>>, %arg2: memref<32x96xbf16, #tpu.memory_space<vmem>>, %arg3: memref<1x96xf32, #tpu.memory_space<vmem>>, %arg4: memref<32x32xbf16, #tpu.memory_space<vmem>>, %arg5: memref<1x32xf32, #tpu.memory_space<vmem>>, %arg6: memref<1x32xf32, #tpu.memory_space<vmem>>, %arg7: memref<1x32xf32, #tpu.memory_space<vmem>>, %arg8: memref<32x64xbf16, #tpu.memory_space<vmem>>, %arg9: memref<1x64xf32, #tpu.memory_space<vmem>>, %arg10: memref<64x32xbf16, #tpu.memory_space<vmem>>, %arg11: memref<1x32xf32, #tpu.memory_space<vmem>>, %arg12: memref<1x32xf32, #tpu.memory_space<vmem>>, %arg13: memref<1x32xf32, #tpu.memory_space<vmem>>, %arg14: memref<1x8x32xf32, #tpu.memory_space<vmem>>) attributes {dimension_semantics = [#tpu.dimension_semantics<parallel>], iteration_bounds = array<i64: 2>, scalar_prefetch = 0 : i64, scratch_operands = 0 : i64, tpu.core_type = #tpu.core_type<tc>, window_params = [{transform_indices = @transform_0, window_bounds = array<i64: 1, 8, 32>}, {pipeline_mode = #tpu.pipeline_mode<synchronous>, transform_indices = @transform_1, window_bounds = array<i64: 32, 96>}, {pipeline_mode = #tpu.pipeline_mode<synchronous>, transform_indices = @transform_2, window_bounds = array<i64: 1, 96>}, {pipeline_mode = #tpu.pipeline_mode<synchronous>, transform_indices = @transform_3, window_bounds = array<i64: 32, 32>}, {pipeline_mode = #tpu.pipeline_mode<synchronous>, transform_indices = @transform_4, window_bounds = array<i64: 1, 32>}, {pipeline_mode = #tpu.pipeline_mode<synchronous>, transform_indices = @transform_5, window_bounds = array<i64: 1, 32>}, {pipeline_mode = #tpu.pipeline_mode<synchronous>, transform_indices = @transform_6, window_bounds = array<i64: 1, 32>}, {pipeline_mode = #tpu.pipeline_mode<synchronous>, transform_indices = @transform_7, window_bounds = array<i64: 32, 64>}, {pipeline_mode = #tpu.pipeline_mode<synchronous>, transform_indices = @transform_8, window_bounds = array<i64: 1, 64>}, {pipeline_mode = #tpu.pipeline_mode<synchronous>, transform_indices = @transform_9, window_bounds = array<i64: 64, 32>}, {pipeline_mode = #tpu.pipeline_mode<synchronous>, transform_indices = @transform_10, window_bounds = array<i64: 1, 32>}, {pipeline_mode = #tpu.pipeline_mode<synchronous>, transform_indices = @transform_11, window_bounds = array<i64: 1, 32>}, {pipeline_mode = #tpu.pipeline_mode<synchronous>, transform_indices = @transform_12, window_bounds = array<i64: 1, 32>}, {transform_indices = @transform_13, window_bounds = array<i64: 1, 8, 32>}]} {
    %c0 = arith.constant 0 : index
    %c0_0 = arith.constant 0 : index
    %c0_1 = arith.constant 0 : index
    %0 = vector.load %arg1[%c0, %c0_0, %c0_1] : memref<1x8x32xf32, #tpu.memory_space<vmem>>, vector<1x8x32xf32>
    %1 = vector.shape_cast %0 : vector<1x8x32xf32> to vector<8x32xf32>
    %2 = arith.truncf %1 : vector<8x32xf32> to vector<8x32xbf16>
    %c0_2 = arith.constant 0 : index
    %c0_3 = arith.constant 0 : index
    %3 = vector.load %arg2[%c0_2, %c0_3] : memref<32x96xbf16, #tpu.memory_space<vmem>>, vector<32x96xbf16>
    %cst = arith.constant dense<0.000000e+00> : vector<8x96xf32>
    %4 = tpu.matmul %2, %3, %cst {dimension_numbers = #tpu.dot_dimension_numbers<[1], [0], [0], [1], [0, 0, 1, 1], [], []>} : vector<8x32xbf16>, vector<32x96xbf16>, vector<8x96xf32> -> vector<8x96xf32>
    %c0_4 = arith.constant 0 : index
    %c0_5 = arith.constant 0 : index
    %5 = vector.load %arg3[%c0_4, %c0_5] : memref<1x96xf32, #tpu.memory_space<vmem>>, vector<1x96xf32>
    %6 = vector.broadcast %5 : vector<1x96xf32> to vector<8x96xf32>
    %7 = arith.addf %4, %6 : vector<8x96xf32>
    %8 = vector.extract_strided_slice %7 {offsets = [0, 0], sizes = [8, 32], strides = [1, 1]} : vector<8x96xf32> to vector<8x32xf32>
    %9 = vector.extract_strided_slice %7 {offsets = [0, 32], sizes = [8, 32], strides = [1, 1]} : vector<8x96xf32> to vector<8x32xf32>
    %10 = vector.extract_strided_slice %7 {offsets = [0, 64], sizes = [8, 32], strides = [1, 1]} : vector<8x96xf32> to vector<8x32xf32>
    %c0_6 = arith.constant 0 : index
    %c0_7 = arith.constant 0 : index
    %11 = vector.load %arg4[%c0_6, %c0_7] : memref<32x32xbf16, #tpu.memory_space<vmem>>, vector<32x32xbf16>
    %12 = vector.extract_strided_slice %8 {offsets = [0, 0], sizes = [8, 8], strides = [1, 1]} : vector<8x32xf32> to vector<8x8xf32>
    %13 = arith.truncf %12 : vector<8x8xf32> to vector<8x8xbf16>
    %14 = vector.extract_strided_slice %9 {offsets = [0, 0], sizes = [8, 8], strides = [1, 1]} : vector<8x32xf32> to vector<8x8xf32>
    %15 = arith.truncf %14 : vector<8x8xf32> to vector<8x8xbf16>
    %16 = vector.extract_strided_slice %10 {offsets = [0, 0], sizes = [8, 8], strides = [1, 1]} : vector<8x32xf32> to vector<8x8xf32>
    %17 = arith.truncf %16 : vector<8x8xf32> to vector<8x8xbf16>
    %cst_8 = arith.constant dense<0.000000e+00> : vector<8x8xf32>
    %18 = tpu.matmul %13, %15, %cst_8 {dimension_numbers = #tpu.dot_dimension_numbers<[1], [1], [0], [0], [0, 0, 1, 0], [], []>} : vector<8x8xbf16>, vector<8x8xbf16>, vector<8x8xf32> -> vector<8x8xf32>
    %cst_9 = arith.constant dense<0xFF800000> : vector<8xf32>
    %19 = vector.multi_reduction <maximumf>, %18, %cst_9 [1] : vector<8x8xf32> to vector<8xf32>
    %20 = vector.shape_cast %19 : vector<8xf32> to vector<8x1xf32>
    %21 = vector.broadcast %20 : vector<8x1xf32> to vector<8x8xf32>
    %22 = arith.subf %18, %21 : vector<8x8xf32>
    %23 = math.exp %22 : vector<8x8xf32>
    %cst_10 = arith.constant dense<0.000000e+00> : vector<8xf32>
    %24 = vector.multi_reduction <add>, %23, %cst_10 [1] : vector<8x8xf32> to vector<8xf32>
    %25 = vector.shape_cast %24 : vector<8xf32> to vector<8x1xf32>
    %26 = tpu.reciprocal %25 {approx = true} : vector<8x1xf32> -> vector<8x1xf32>
    %27 = vector.broadcast %26 : vector<8x1xf32> to vector<8x8xf32>
    %28 = arith.mulf %23, %27 : vector<8x8xf32>
    %29 = arith.truncf %28 : vector<8x8xf32> to vector<8x8xbf16>
    %cst_11 = arith.constant dense<0.000000e+00> : vector<8x8xf32>
    %30 = tpu.matmul %29, %17, %cst_11 {dimension_numbers = #tpu.dot_dimension_numbers<[1], [0], [0], [1], [0, 0, 1, 1], [], []>} : vector<8x8xbf16>, vector<8x8xbf16>, vector<8x8xf32> -> vector<8x8xf32>
    %31 = arith.truncf %30 : vector<8x8xf32> to vector<8x8xbf16>
    %32 = vector.extract_strided_slice %11 {offsets = [0, 0], sizes = [8, 32], strides = [1, 1]} : vector<32x32xbf16> to vector<8x32xbf16>
    %cst_12 = arith.constant dense<0.000000e+00> : vector<8x32xf32>
    %33 = tpu.matmul %31, %32, %cst_12 {dimension_numbers = #tpu.dot_dimension_numbers<[1], [0], [0], [1], [0, 0, 1, 1], [], []>} : vector<8x8xbf16>, vector<8x32xbf16>, vector<8x32xf32> -> vector<8x32xf32>
    %34 = vector.extract_strided_slice %8 {offsets = [0, 8], sizes = [8, 8], strides = [1, 1]} : vector<8x32xf32> to vector<8x8xf32>
    %35 = arith.truncf %34 : vector<8x8xf32> to vector<8x8xbf16>
    %36 = vector.extract_strided_slice %9 {offsets = [0, 8], sizes = [8, 8], strides = [1, 1]} : vector<8x32xf32> to vector<8x8xf32>
    %37 = arith.truncf %36 : vector<8x8xf32> to vector<8x8xbf16>
    %38 = vector.extract_strided_slice %10 {offsets = [0, 8], sizes = [8, 8], strides = [1, 1]} : vector<8x32xf32> to vector<8x8xf32>
    %39 = arith.truncf %38 : vector<8x8xf32> to vector<8x8xbf16>
    %cst_13 = arith.constant dense<0.000000e+00> : vector<8x8xf32>
    %40 = tpu.matmul %35, %37, %cst_13 {dimension_numbers = #tpu.dot_dimension_numbers<[1], [1], [0], [0], [0, 0, 1, 0], [], []>} : vector<8x8xbf16>, vector<8x8xbf16>, vector<8x8xf32> -> vector<8x8xf32>
    %cst_14 = arith.constant dense<0xFF800000> : vector<8xf32>
    %41 = vector.multi_reduction <maximumf>, %40, %cst_14 [1] : vector<8x8xf32> to vector<8xf32>
    %42 = vector.shape_cast %41 : vector<8xf32> to vector<8x1xf32>
    %43 = vector.broadcast %42 : vector<8x1xf32> to vector<8x8xf32>
    %44 = arith.subf %40, %43 : vector<8x8xf32>
    %45 = math.exp %44 : vector<8x8xf32>
    %cst_15 = arith.constant dense<0.000000e+00> : vector<8xf32>
    %46 = vector.multi_reduction <add>, %45, %cst_15 [1] : vector<8x8xf32> to vector<8xf32>
    %47 = vector.shape_cast %46 : vector<8xf32> to vector<8x1xf32>
    %48 = tpu.reciprocal %47 {approx = true} : vector<8x1xf32> -> vector<8x1xf32>
    %49 = vector.broadcast %48 : vector<8x1xf32> to vector<8x8xf32>
    %50 = arith.mulf %45, %49 : vector<8x8xf32>
    %51 = arith.truncf %50 : vector<8x8xf32> to vector<8x8xbf16>
    %cst_16 = arith.constant dense<0.000000e+00> : vector<8x8xf32>
    %52 = tpu.matmul %51, %39, %cst_16 {dimension_numbers = #tpu.dot_dimension_numbers<[1], [0], [0], [1], [0, 0, 1, 1], [], []>} : vector<8x8xbf16>, vector<8x8xbf16>, vector<8x8xf32> -> vector<8x8xf32>
    %53 = arith.truncf %52 : vector<8x8xf32> to vector<8x8xbf16>
    %54 = vector.extract_strided_slice %11 {offsets = [8, 0], sizes = [8, 32], strides = [1, 1]} : vector<32x32xbf16> to vector<8x32xbf16>
    %cst_17 = arith.constant dense<0.000000e+00> : vector<8x32xf32>
    %55 = tpu.matmul %53, %54, %cst_17 {dimension_numbers = #tpu.dot_dimension_numbers<[1], [0], [0], [1], [0, 0, 1, 1], [], []>} : vector<8x8xbf16>, vector<8x32xbf16>, vector<8x32xf32> -> vector<8x32xf32>
    %56 = arith.addf %33, %55 : vector<8x32xf32>
    %57 = vector.extract_strided_slice %8 {offsets = [0, 16], sizes = [8, 8], strides = [1, 1]} : vector<8x32xf32> to vector<8x8xf32>
    %58 = arith.truncf %57 : vector<8x8xf32> to vector<8x8xbf16>
    %59 = vector.extract_strided_slice %9 {offsets = [0, 16], sizes = [8, 8], strides = [1, 1]} : vector<8x32xf32> to vector<8x8xf32>
    %60 = arith.truncf %59 : vector<8x8xf32> to vector<8x8xbf16>
    %61 = vector.extract_strided_slice %10 {offsets = [0, 16], sizes = [8, 8], strides = [1, 1]} : vector<8x32xf32> to vector<8x8xf32>
    %62 = arith.truncf %61 : vector<8x8xf32> to vector<8x8xbf16>
    %cst_18 = arith.constant dense<0.000000e+00> : vector<8x8xf32>
    %63 = tpu.matmul %58, %60, %cst_18 {dimension_numbers = #tpu.dot_dimension_numbers<[1], [1], [0], [0], [0, 0, 1, 0], [], []>} : vector<8x8xbf16>, vector<8x8xbf16>, vector<8x8xf32> -> vector<8x8xf32>
    %cst_19 = arith.constant dense<0xFF800000> : vector<8xf32>
    %64 = vector.multi_reduction <maximumf>, %63, %cst_19 [1] : vector<8x8xf32> to vector<8xf32>
    %65 = vector.shape_cast %64 : vector<8xf32> to vector<8x1xf32>
    %66 = vector.broadcast %65 : vector<8x1xf32> to vector<8x8xf32>
    %67 = arith.subf %63, %66 : vector<8x8xf32>
    %68 = math.exp %67 : vector<8x8xf32>
    %cst_20 = arith.constant dense<0.000000e+00> : vector<8xf32>
    %69 = vector.multi_reduction <add>, %68, %cst_20 [1] : vector<8x8xf32> to vector<8xf32>
    %70 = vector.shape_cast %69 : vector<8xf32> to vector<8x1xf32>
    %71 = tpu.reciprocal %70 {approx = true} : vector<8x1xf32> -> vector<8x1xf32>
    %72 = vector.broadcast %71 : vector<8x1xf32> to vector<8x8xf32>
    %73 = arith.mulf %68, %72 : vector<8x8xf32>
    %74 = arith.truncf %73 : vector<8x8xf32> to vector<8x8xbf16>
    %cst_21 = arith.constant dense<0.000000e+00> : vector<8x8xf32>
    %75 = tpu.matmul %74, %62, %cst_21 {dimension_numbers = #tpu.dot_dimension_numbers<[1], [0], [0], [1], [0, 0, 1, 1], [], []>} : vector<8x8xbf16>, vector<8x8xbf16>, vector<8x8xf32> -> vector<8x8xf32>
    %76 = arith.truncf %75 : vector<8x8xf32> to vector<8x8xbf16>
    %77 = vector.extract_strided_slice %11 {offsets = [16, 0], sizes = [8, 32], strides = [1, 1]} : vector<32x32xbf16> to vector<8x32xbf16>
    %cst_22 = arith.constant dense<0.000000e+00> : vector<8x32xf32>
    %78 = tpu.matmul %76, %77, %cst_22 {dimension_numbers = #tpu.dot_dimension_numbers<[1], [0], [0], [1], [0, 0, 1, 1], [], []>} : vector<8x8xbf16>, vector<8x32xbf16>, vector<8x32xf32> -> vector<8x32xf32>
    %79 = arith.addf %56, %78 : vector<8x32xf32>
    %80 = vector.extract_strided_slice %8 {offsets = [0, 24], sizes = [8, 8], strides = [1, 1]} : vector<8x32xf32> to vector<8x8xf32>
    %81 = arith.truncf %80 : vector<8x8xf32> to vector<8x8xbf16>
    %82 = vector.extract_strided_slice %9 {offsets = [0, 24], sizes = [8, 8], strides = [1, 1]} : vector<8x32xf32> to vector<8x8xf32>
    %83 = arith.truncf %82 : vector<8x8xf32> to vector<8x8xbf16>
    %84 = vector.extract_strided_slice %10 {offsets = [0, 24], sizes = [8, 8], strides = [1, 1]} : vector<8x32xf32> to vector<8x8xf32>
    %85 = arith.truncf %84 : vector<8x8xf32> to vector<8x8xbf16>
    %cst_23 = arith.constant dense<0.000000e+00> : vector<8x8xf32>
    %86 = tpu.matmul %81, %83, %cst_23 {dimension_numbers = #tpu.dot_dimension_numbers<[1], [1], [0], [0], [0, 0, 1, 0], [], []>} : vector<8x8xbf16>, vector<8x8xbf16>, vector<8x8xf32> -> vector<8x8xf32>
    %cst_24 = arith.constant dense<0xFF800000> : vector<8xf32>
    %87 = vector.multi_reduction <maximumf>, %86, %cst_24 [1] : vector<8x8xf32> to vector<8xf32>
    %88 = vector.shape_cast %87 : vector<8xf32> to vector<8x1xf32>
    %89 = vector.broadcast %88 : vector<8x1xf32> to vector<8x8xf32>
    %90 = arith.subf %86, %89 : vector<8x8xf32>
    %91 = math.exp %90 : vector<8x8xf32>
    %cst_25 = arith.constant dense<0.000000e+00> : vector<8xf32>
    %92 = vector.multi_reduction <add>, %91, %cst_25 [1] : vector<8x8xf32> to vector<8xf32>
    %93 = vector.shape_cast %92 : vector<8xf32> to vector<8x1xf32>
    %94 = tpu.reciprocal %93 {approx = true} : vector<8x1xf32> -> vector<8x1xf32>
    %95 = vector.broadcast %94 : vector<8x1xf32> to vector<8x8xf32>
    %96 = arith.mulf %91, %95 : vector<8x8xf32>
    %97 = arith.truncf %96 : vector<8x8xf32> to vector<8x8xbf16>
    %cst_26 = arith.constant dense<0.000000e+00> : vector<8x8xf32>
    %98 = tpu.matmul %97, %85, %cst_26 {dimension_numbers = #tpu.dot_dimension_numbers<[1], [0], [0], [1], [0, 0, 1, 1], [], []>} : vector<8x8xbf16>, vector<8x8xbf16>, vector<8x8xf32> -> vector<8x8xf32>
    %99 = arith.truncf %98 : vector<8x8xf32> to vector<8x8xbf16>
    %100 = vector.extract_strided_slice %11 {offsets = [24, 0], sizes = [8, 32], strides = [1, 1]} : vector<32x32xbf16> to vector<8x32xbf16>
    %cst_27 = arith.constant dense<0.000000e+00> : vector<8x32xf32>
    %101 = tpu.matmul %99, %100, %cst_27 {dimension_numbers = #tpu.dot_dimension_numbers<[1], [0], [0], [1], [0, 0, 1, 1], [], []>} : vector<8x8xbf16>, vector<8x32xbf16>, vector<8x32xf32> -> vector<8x32xf32>
    %102 = arith.addf %79, %101 : vector<8x32xf32>
    %c0_28 = arith.constant 0 : index
    %c0_29 = arith.constant 0 : index
    %103 = vector.load %arg5[%c0_28, %c0_29] : memref<1x32xf32, #tpu.memory_space<vmem>>, vector<1x32xf32>
    %104 = vector.broadcast %103 : vector<1x32xf32> to vector<8x32xf32>
    %105 = arith.addf %102, %104 : vector<8x32xf32>
    %106 = arith.addf %1, %105 : vector<8x32xf32>
    %c0_30 = arith.constant 0 : index
    %c0_31 = arith.constant 0 : index
    %107 = vector.load %arg6[%c0_30, %c0_31] : memref<1x32xf32, #tpu.memory_space<vmem>>, vector<1x32xf32>
    %c0_32 = arith.constant 0 : index
    %c0_33 = arith.constant 0 : index
    %108 = vector.load %arg7[%c0_32, %c0_33] : memref<1x32xf32, #tpu.memory_space<vmem>>, vector<1x32xf32>
    %cst_34 = arith.constant dense<0.000000e+00> : vector<8xf32>
    %109 = vector.multi_reduction <add>, %106, %cst_34 [1] : vector<8x32xf32> to vector<8xf32>
    %110 = vector.shape_cast %109 : vector<8xf32> to vector<8x1xf32>
    %cst_35 = arith.constant 3.200000e+01 : f32
    %111 = vector.broadcast %cst_35 : f32 to vector<8x1xf32>
    %112 = arith.divf %110, %111 : vector<8x1xf32>
    %113 = vector.broadcast %112 : vector<8x1xf32> to vector<8x32xf32>
    %114 = arith.subf %106, %113 : vector<8x32xf32>
    %115 = vector.broadcast %112 : vector<8x1xf32> to vector<8x32xf32>
    %116 = arith.subf %106, %115 : vector<8x32xf32>
    %117 = arith.mulf %114, %116 : vector<8x32xf32>
    %cst_36 = arith.constant dense<0.000000e+00> : vector<8xf32>
    %118 = vector.multi_reduction <add>, %117, %cst_36 [1] : vector<8x32xf32> to vector<8xf32>
    %119 = vector.shape_cast %118 : vector<8xf32> to vector<8x1xf32>
    %cst_37 = arith.constant 3.200000e+01 : f32
    %120 = vector.broadcast %cst_37 : f32 to vector<8x1xf32>
    %121 = arith.divf %119, %120 : vector<8x1xf32>
    %122 = vector.broadcast %112 : vector<8x1xf32> to vector<8x32xf32>
    %123 = arith.subf %106, %122 : vector<8x32xf32>
    %cst_38 = arith.constant 9.99999974E-6 : f32
    %124 = vector.broadcast %cst_38 : f32 to vector<8x1xf32>
    %125 = arith.addf %121, %124 : vector<8x1xf32>
    %126 = math.rsqrt %125 : vector<8x1xf32>
    %127 = vector.broadcast %126 : vector<8x1xf32> to vector<8x32xf32>
    %128 = arith.mulf %123, %127 : vector<8x32xf32>
    %129 = vector.broadcast %107 : vector<1x32xf32> to vector<8x32xf32>
    %130 = arith.mulf %128, %129 : vector<8x32xf32>
    %131 = vector.broadcast %108 : vector<1x32xf32> to vector<8x32xf32>
    %132 = arith.addf %130, %131 : vector<8x32xf32>
    %133 = arith.truncf %132 : vector<8x32xf32> to vector<8x32xbf16>
    %c0_39 = arith.constant 0 : index
    %c0_40 = arith.constant 0 : index
    %134 = vector.load %arg8[%c0_39, %c0_40] : memref<32x64xbf16, #tpu.memory_space<vmem>>, vector<32x64xbf16>
    %cst_41 = arith.constant dense<0.000000e+00> : vector<8x64xf32>
    %135 = tpu.matmul %133, %134, %cst_41 {dimension_numbers = #tpu.dot_dimension_numbers<[1], [0], [0], [1], [0, 0, 1, 1], [], []>} : vector<8x32xbf16>, vector<32x64xbf16>, vector<8x64xf32> -> vector<8x64xf32>
    %c0_42 = arith.constant 0 : index
    %c0_43 = arith.constant 0 : index
    %136 = vector.load %arg9[%c0_42, %c0_43] : memref<1x64xf32, #tpu.memory_space<vmem>>, vector<1x64xf32>
    %137 = vector.broadcast %136 : vector<1x64xf32> to vector<8x64xf32>
    %138 = arith.addf %135, %137 : vector<8x64xf32>
    %cst_44 = arith.constant 0.000000e+00 : f32
    %139 = vector.broadcast %cst_44 : f32 to vector<8x64xf32>
    %140 = arith.maximumf %138, %139 : vector<8x64xf32>
    %141 = arith.truncf %140 : vector<8x64xf32> to vector<8x64xbf16>
    %c0_45 = arith.constant 0 : index
    %c0_46 = arith.constant 0 : index
    %142 = vector.load %arg10[%c0_45, %c0_46] : memref<64x32xbf16, #tpu.memory_space<vmem>>, vector<64x32xbf16>
    %cst_47 = arith.constant dense<0.000000e+00> : vector<8x32xf32>
    %143 = tpu.matmul %141, %142, %cst_47 {dimension_numbers = #tpu.dot_dimension_numbers<[1], [0], [0], [1], [0, 0, 1, 1], [], []>} : vector<8x64xbf16>, vector<64x32xbf16>, vector<8x32xf32> -> vector<8x32xf32>
    %c0_48 = arith.constant 0 : index
    %c0_49 = arith.constant 0 : index
    %144 = vector.load %arg11[%c0_48, %c0_49] : memref<1x32xf32, #tpu.memory_space<vmem>>, vector<1x32xf32>
    %145 = vector.broadcast %144 : vector<1x32xf32> to vector<8x32xf32>
    %146 = arith.addf %143, %145 : vector<8x32xf32>
    %147 = arith.addf %132, %146 : vector<8x32xf32>
    %c0_50 = arith.constant 0 : index
    %c0_51 = arith.constant 0 : index
    %148 = vector.load %arg12[%c0_50, %c0_51] : memref<1x32xf32, #tpu.memory_space<vmem>>, vector<1x32xf32>
    %c0_52 = arith.constant 0 : index
    %c0_53 = arith.constant 0 : index
    %149 = vector.load %arg13[%c0_52, %c0_53] : memref<1x32xf32, #tpu.memory_space<vmem>>, vector<1x32xf32>
    %cst_54 = arith.constant dense<0.000000e+00> : vector<8xf32>
    %150 = vector.multi_reduction <add>, %147, %cst_54 [1] : vector<8x32xf32> to vector<8xf32>
    %151 = vector.shape_cast %150 : vector<8xf32> to vector<8x1xf32>
    %cst_55 = arith.constant 3.200000e+01 : f32
    %152 = vector.broadcast %cst_55 : f32 to vector<8x1xf32>
    %153 = arith.divf %151, %152 : vector<8x1xf32>
    %154 = vector.broadcast %153 : vector<8x1xf32> to vector<8x32xf32>
    %155 = arith.subf %147, %154 : vector<8x32xf32>
    %156 = vector.broadcast %153 : vector<8x1xf32> to vector<8x32xf32>
    %157 = arith.subf %147, %156 : vector<8x32xf32>
    %158 = arith.mulf %155, %157 : vector<8x32xf32>
    %cst_56 = arith.constant dense<0.000000e+00> : vector<8xf32>
    %159 = vector.multi_reduction <add>, %158, %cst_56 [1] : vector<8x32xf32> to vector<8xf32>
    %160 = vector.shape_cast %159 : vector<8xf32> to vector<8x1xf32>
    %cst_57 = arith.constant 3.200000e+01 : f32
    %161 = vector.broadcast %cst_57 : f32 to vector<8x1xf32>
    %162 = arith.divf %160, %161 : vector<8x1xf32>
    %163 = vector.broadcast %153 : vector<8x1xf32> to vector<8x32xf32>
    %164 = arith.subf %147, %163 : vector<8x32xf32>
    %cst_58 = arith.constant 9.99999974E-6 : f32
    %165 = vector.broadcast %cst_58 : f32 to vector<8x1xf32>
    %166 = arith.addf %162, %165 : vector<8x1xf32>
    %167 = math.rsqrt %166 : vector<8x1xf32>
    %168 = vector.broadcast %167 : vector<8x1xf32> to vector<8x32xf32>
    %169 = arith.mulf %164, %168 : vector<8x32xf32>
    %170 = vector.broadcast %148 : vector<1x32xf32> to vector<8x32xf32>
    %171 = arith.mulf %169, %170 : vector<8x32xf32>
    %172 = vector.broadcast %149 : vector<1x32xf32> to vector<8x32xf32>
    %173 = arith.addf %171, %172 : vector<8x32xf32>
    %c0_59 = arith.constant 0 : index
    %c0_60 = arith.constant 0 : index
    %c0_61 = arith.constant 0 : index
    %174 = vector.load %arg14[%c0_59, %c0_60, %c0_61] : memref<1x8x32xf32, #tpu.memory_space<vmem>>, vector<1x8x32xf32>
    %175 = vector.shape_cast %174 : vector<1x8x32xf32> to vector<8x32xf32>
    %176 = vector.shape_cast %173 : vector<8x32xf32> to vector<1x8x32xf32>
    tpu.vector_store %arg14[%c0_59, %c0_60, %c0_61], %176 {strides = array<i32>} : memref<1x8x32xf32, #tpu.memory_space<vmem>>, vector<1x8x32xf32>,
    return
  }
  func.func @transform_0(%arg0: i32) -> (i32, i32, i32) {
    %c0_i32 = arith.constant 0 : i32
    %c0_i32_0 = arith.constant 0 : i32
    %c0_i32_1 = arith.constant 0 : i32
    return %arg0, %c0_i32, %c0_i32_0 : i32, i32, i32
  }
  func.func @transform_1(%arg0: i32) -> (i32, i32) {
    %c0_i32 = arith.constant 0 : i32
    %c0_i32_0 = arith.constant 0 : i32
    %c0_i32_1 = arith.constant 0 : i32
    return %c0_i32, %c0_i32_0 : i32, i32
  }
  func.func @transform_2(%arg0: i32) -> (i32, i32) {
    %c0_i32 = arith.constant 0 : i32
    %c0_i32_0 = arith.constant 0 : i32
    %c0_i32_1 = arith.constant 0 : i32
    return %c0_i32, %c0_i32_0 : i32, i32
  }
  func.func @transform_3(%arg0: i32) -> (i32, i32) {
    %c0_i32 = arith.constant 0 : i32
    %c0_i32_0 = arith.constant 0 : i32
    %c0_i32_1 = arith.constant 0 : i32
    return %c0_i32, %c0_i32_0 : i32, i32
  }
  func.func @transform_4(%arg0: i32) -> (i32, i32) {
    %c0_i32 = arith.constant 0 : i32
    %c0_i32_0 = arith.constant 0 : i32
    %c0_i32_1 = arith.constant 0 : i32
    return %c0_i32, %c0_i32_0 : i32, i32
  }
  func.func @transform_5(%arg0: i32) -> (i32, i32) {
    %c0_i32 = arith.constant 0 : i32
    %c0_i32_0 = arith.constant 0 : i32
    %c0_i32_1 = arith.constant 0 : i32
    return %c0_i32, %c0_i32_0 : i32, i32
  }
  func.func @transform_6(%arg0: i32) -> (i32, i32) {
    %c0_i32 = arith.constant 0 : i32
    %c0_i32_0 = arith.constant 0 : i32
    %c0_i32_1 = arith.constant 0 : i32
    return %c0_i32, %c0_i32_0 : i32, i32
  }
  func.func @transform_7(%arg0: i32) -> (i32, i32) {
    %c0_i32 = arith.constant 0 : i32
    %c0_i32_0 = arith.constant 0 : i32
    %c0_i32_1 = arith.constant 0 : i32
    return %c0_i32, %c0_i32_0 : i32, i32
  }
  func.func @transform_8(%arg0: i32) -> (i32, i32) {
    %c0_i32 = arith.constant 0 : i32
    %c0_i32_0 = arith.constant 0 : i32
    %c0_i32_1 = arith.constant 0 : i32
    return %c0_i32, %c0_i32_0 : i32, i32
  }
  func.func @transform_9(%arg0: i32) -> (i32, i32) {
    %c0_i32 = arith.constant 0 : i32
    %c0_i32_0 = arith.constant 0 : i32
    %c0_i32_1 = arith.constant 0 : i32
    return %c0_i32, %c0_i32_0 : i32, i32
  }
  func.func @transform_10(%arg0: i32) -> (i32, i32) {
    %c0_i32 = arith.constant 0 : i32
    %c0_i32_0 = arith.constant 0 : i32
    %c0_i32_1 = arith.constant 0 : i32
    return %c0_i32, %c0_i32_0 : i32, i32
  }
  func.func @transform_11(%arg0: i32) -> (i32, i32) {
    %c0_i32 = arith.constant 0 : i32
    %c0_i32_0 = arith.constant 0 : i32
    %c0_i32_1 = arith.constant 0 : i32
    return %c0_i32, %c0_i32_0 : i32, i32
  }
  func.func @transform_12(%arg0: i32) -> (i32, i32) {
    %c0_i32 = arith.constant 0 : i32
    %c0_i32_0 = arith.constant 0 : i32
    %c0_i32_1 = arith.constant 0 : i32
    return %c0_i32, %c0_i32_0 : i32, i32
  }
  func.func @transform_13(%arg0: i32) -> (i32, i32, i32) {
    %c0_i32 = arith.constant 0 : i32
    %c0_i32_0 = arith.constant 0 : i32
    %c0_i32_1 = arith.constant 0 : i32
    return %arg0, %c0_i32, %c0_i32_0 : i32, i32, i32
  }
}

</mosaic_0001>

<llo_original>
// kernel: tpu_custom_call.1
$region0: #{tpu_custom_call.1}
  #allocation0 [shape = 'u32[]', space=smem, size = 0x4, offset = 0x4, fixed_abs, tag = 'smem constant byte address 0x4 - core index']
  #allocation1 [shape = 'u32[72,128]{1,0:T(1,128)}', space=vmem, size = 0x9000, scoped, tag = 'internal scratch']
  %s0 = inlined_call_operand.vmem [shape: f32[2,8,32], index: 0, kind: input, shape index: {}]
  %s1 = inlined_call_operand.vmem [shape: bf16[32,96], index: 1, kind: input, shape index: {}]
  %s2 = inlined_call_operand.vmem [shape: f32[1,96], index: 2, kind: input, shape index: {}]
  %s3 = inlined_call_operand.vmem [shape: bf16[32,32], index: 3, kind: input, shape index: {}]
  %s4 = inlined_call_operand.vmem [shape: f32[1,32], index: 4, kind: input, shape index: {}]
  %s5 = inlined_call_operand.vmem [shape: f32[1,32], index: 5, kind: input, shape index: {}]
  %s6 = inlined_call_operand.vmem [shape: f32[1,32], index: 6, kind: input, shape index: {}]
  %s7 = inlined_call_operand.hbm [shape: bf16[32,64], index: 7, kind: input, shape index: {}]
  %s8 = inlined_call_operand.vmem [shape: f32[1,64], index: 8, kind: input, shape index: {}]
  %s9 = inlined_call_operand.vmem [shape: bf16[64,32], index: 9, kind: input, shape index: {}]
  %s10 = inlined_call_operand.vmem [shape: f32[1,32], index: 10, kind: input, shape index: {}]
  %s11 = inlined_call_operand.vmem [shape: f32[1,32], index: 11, kind: input, shape index: {}]
  %s12 = inlined_call_operand.vmem [shape: f32[1,32], index: 12, kind: input, shape index: {}]
  %s13 = inlined_call_operand.hbm [shape: f32[2,8,32], index: 13, kind: output, shape index: {}]
  %s14 = sld [smem:[#allocation0]]
  $region89: #{tpu_custom_call.1} parent=0
    _
  %s16 = ssub.s32 1, %s14
  %s17 = scalar_select 0, %s16, %s14
  $region1: #{tpu_custom_call.1} parent=0
    #allocation2 [shape = 'u8[8192]{0}', space=vmem, size = 0x2000, scoped, tag = 'input window, operand 7, single buffered']
    #allocation3 [shape = 's32[2]{0}', space=sflag, size = 0x8, scoped, tag = 'scoped memory for tpu_custom_call.1']
    #allocation4 [shape = 's32[2]{0}', space=sflag, size = 0x8, scoped, tag = 'scoped memory for tpu_custom_call.1']
    #allocation5 [shape = 'u8[8192]{0}', space=vmem, size = 0x2000, scoped, tag = 'output window, operand 0']
    %18 = vsyncpa [#allocation3], 0
    %19 = vsyncpa [#allocation4], 0
    %s20 = scalar_lea.sflag [#allocation4], 1
    %21 = vsyncpa %s20, 0
    loop: start=0, step=1, limit=4
    $region2: #{tpu_custom_call.1} parent=1 // loop_pre_header
      _
    $region3: #{tpu_custom_call.1} parent=1 // loop_header
      %s23 = sphi 0, %s27
      %p24 = scmp.ge.s32.totalorder %s23, 4
      %s33 = sphi 0, %s35
      %s36 = sphi 0, %s33
      %s37 = sphi 0, %s36
      %s53 = sphi 0, %s37
      %s57 = sphi 0, %s57
      %s59 = sphi 0, %s57
      %s60 = sphi 0, %s59
      %s74 = sphi 0, %s60
      %s78 = sphi 0, %s78
      %s80 = sphi 0, %s78
      %s81 = sphi 0, %s80
      %s95 = sphi 0, %s81
      %s99 = sphi 0, %s99
      %s101 = sphi 0, %s99
      %s102 = sphi 0, %s101
      %s116 = sphi 0, %s102
      %s120 = sphi 0, %s120
      %s122 = sphi 0, %s120
      %s123 = sphi 0, %s122
      %s137 = sphi 0, %s123
      %s141 = sphi 0, %s141
      %s143 = sphi 0, %s141
      %s144 = sphi 0, %s143
      %s158 = sphi 0, %s144
      %s162 = sphi 0, %s162
      %s164 = sphi 0, %s162
      %s165 = sphi 0, %s164
      %s179 = sphi 0, %s165
      %s183 = sphi 0, %s183
      %s185 = sphi 0, %s183
      %s186 = sphi 0, %s185
      %s200 = sphi 0, %s186
      %s204 = sphi 0, %s204
      %s206 = sphi 0, %s204
      %s207 = sphi 0, %s206
      %s221 = sphi 0, %s207
      %s225 = sphi 0, %s225
      %s227 = sphi 0, %s225
      %s228 = sphi 0, %s227
      %s242 = sphi 0, %s228
      %s246 = sphi 0, %s246
      %s248 = sphi 0, %s246
      %s249 = sphi 0, %s248
      %s263 = sphi 0, %s249
      %s267 = sphi 0, %s267
      %s269 = sphi 0, %s267
      %s270 = sphi 0, %s269
      %s284 = sphi 0, %s270
      %s288 = sphi 0, %s288
      %s290 = sphi 0, %s288
      %s291 = sphi 0, %s290
      %s305 = sphi 0, %s291
      %s311 = sphi 0, %s313
      %s314 = sphi 0, %s311
      %s315 = sphi 0, %s314
      %s331 = sphi 0, %s315
    $region4: #{tpu_custom_call.1} parent=1 // loop_header_branch
      %26 = sbr.rel (%p24) target = $region8
    $region5: #{tpu_custom_call.1} parent=1 // loop_body
      %s28 = ssub.s32 %s23, 1
      %s29 = ssub.s32 %s23, 2
      %s30 = sadd.s32 %s23, 1
      %s31 = ssub.s32 %s23, %s30
      %p32 = scmp.eq.s32.totalorder %s31, 0
      %s34 = sadd.s32 %s33, 1
      %s35 = scalar_select %p32, %s33, %s34
      %p38 = pneg %p32
      %p39 = scmp.eq.s32.totalorder %s23, 1
      %p40 = por %p38, %p39
      %p41 = scmp.ne.s32.totalorder %s33, %s36
      %p42 = scmp.eq.s32.totalorder %s23, 0
      %p43 = por %p41, %p42
      %p44 = scmp.ne.s32.totalorder %s33, %s36
      %p45 = scmp.eq.s32.totalorder %s28, 1
      %p46 = por %p44, %p45
      %p47 = scmp.ne.s32.totalorder %s36, %s37
      %p48 = scmp.eq.s32.totalorder %s28, 0
      %p49 = por %p47, %p48
      %p50 = scmp.ne.s32.totalorder %s36, %s37
      %p51 = scmp.eq.s32.totalorder %s29, 1
      %p52 = por %p50, %p51
      %p54 = scmp.ne.s32.totalorder %s37, %s53
      %p55 = scmp.eq.s32.totalorder %s29, 0
      %p56 = por %p54, %p55
      %s58 = sadd.s32 %s57, 1
      %p61 = scmp.eq.s32.totalorder %s23, 1
      %p62 = scmp.ne.s32.totalorder %s57, %s59
      %p63 = scmp.eq.s32.totalorder %s23, 0
      %p64 = por %p62, %p63
      %p65 = scmp.ne.s32.totalorder %s57, %s59
      %p66 = scmp.eq.s32.totalorder %s28, 1
      %p67 = por %p65, %p66
      %p68 = scmp.ne.s32.totalorder %s59, %s60
      %p69 = scmp.eq.s32.totalorder %s28, 0
      %p70 = por %p68, %p69
      %p71 = scmp.ne.s32.totalorder %s59, %s60
      %p72 = scmp.eq.s32.totalorder %s29, 1
      %p73 = por %p71, %p72
      %p75 = scmp.ne.s32.totalorder %s60, %s74
      %p76 = scmp.eq.s32.totalorder %s29, 0
      %p77 = por %p75, %p76
      %s79 = sadd.s32 %s78, 1
      %p82 = scmp.eq.s32.totalorder %s23, 1
      %p83 = scmp.ne.s32.totalorder %s78, %s80
      %p84 = scmp.eq.s32.totalorder %s23, 0
      %p85 = por %p83, %p84
      %p86 = scmp.ne.s32.totalorder %s78, %s80
      %p87 = scmp.eq.s32.totalorder %s28, 1
      %p88 = por %p86, %p87
      %p89 = scmp.ne.s32.totalorder %s80, %s81
      %p90 = scmp.eq.s32.totalorder %s28, 0
      %p91 = por %p89, %p90
      %p92 = scmp.ne.s32.totalorder %s80, %s81
      %p93 = scmp.eq.s32.totalorder %s29, 1
      %p94 = por %p92, %p93
      %p96 = scmp.ne.s32.totalorder %s81, %s95
      %p97 = scmp.eq.s32.totalorder %s29, 0
      %p98 = por %p96, %p97
      %s100 = sadd.s32 %s99, 1
      %p103 = scmp.eq.s32.totalorder %s23, 1
      %p104 = scmp.ne.s32.totalorder %s99, %s101
      %p105 = scmp.eq.s32.totalorder %s23, 0
      %p106 = por %p104, %p105
      %p107 = scmp.ne.s32.totalorder %s99, %s101
      %p108 = scmp.eq.s32.totalorder %s28, 1
      %p109 = por %p107, %p108
      %p110 = scmp.ne.s32.totalorder %s101, %s102
      %p111 = scmp.eq.s32.totalorder %s28, 0
      %p112 = por %p110, %p111
      %p113 = scmp.ne.s32.totalorder %s101, %s102
      %p114 = scmp.eq.s32.totalorder %s29, 1
      %p115 = por %p113, %p114
      %p117 = scmp.ne.s32.totalorder %s102, %s116
      %p118 = scmp.eq.s32.totalorder %s29, 0
      %p119 = por %p117, %p118
      %s121 = sadd.s32 %s120, 1
      %p124 = scmp.eq.s32.totalorder %s23, 1
      %p125 = scmp.ne.s32.totalorder %s120, %s122
      %p126 = scmp.eq.s32.totalorder %s23, 0
      %p127 = por %p125, %p126
      %p128 = scmp.ne.s32.totalorder %s120, %s122
      %p129 = scmp.eq.s32.totalorder %s28, 1
      %p130 = por %p128, %p129
      %p131 = scmp.ne.s32.totalorder %s122, %s123
      %p132 = scmp.eq.s32.totalorder %s28, 0
      %p133 = por %p131, %p132
      %p134 = scmp.ne.s32.totalorder %s122, %s123
      %p135 = scmp.eq.s32.totalorder %s29, 1
      %p136 = por %p134, %p135
      %p138 = scmp.ne.s32.totalorder %s123, %s137
      %p139 = scmp.eq.s32.totalorder %s29, 0
      %p140 = por %p138, %p139
      %s142 = sadd.s32 %s141, 1
      %p145 = scmp.eq.s32.totalorder %s23, 1
      %p146 = scmp.ne.s32.totalorder %s141, %s143
      %p147 = scmp.eq.s32.totalorder %s23, 0
      %p148 = por %p146, %p147
      %p149 = scmp.ne.s32.totalorder %s141, %s143
      %p150 = scmp.eq.s32.totalorder %s28, 1
      %p151 = por %p149, %p150
      %p152 = scmp.ne.s32.totalorder %s143, %s144
      %p153 = scmp.eq.s32.totalorder %s28, 0
      %p154 = por %p152, %p153
      %p155 = scmp.ne.s32.totalorder %s143, %s144
      %p156 = scmp.eq.s32.totalorder %s29, 1
      %p157 = por %p155, %p156
      %p159 = scmp.ne.s32.totalorder %s144, %s158
      %p160 = scmp.eq.s32.totalorder %s29, 0
      %p161 = por %p159, %p160
      %s163 = sadd.s32 %s162, 1
      %p166 = scmp.eq.s32.totalorder %s23, 1
      %p167 = scmp.ne.s32.totalorder %s162, %s164
      %p168 = scmp.eq.s32.totalorder %s23, 0
      %p169 = por %p167, %p168
      %p170 = scmp.ne.s32.totalorder %s162, %s164
      %p171 = scmp.eq.s32.totalorder %s28, 1
      %p172 = por %p170, %p171
      %p173 = scmp.ne.s32.totalorder %s164, %s165
      %p174 = scmp.eq.s32.totalorder %s28, 0
      %p175 = por %p173, %p174
      %p176 = scmp.ne.s32.totalorder %s164, %s165
      %p177 = scmp.eq.s32.totalorder %s29, 1
      %p178 = por %p176, %p177
      %p180 = scmp.ne.s32.totalorder %s165, %s179
      %p181 = scmp.eq.s32.totalorder %s29, 0
      %p182 = por %p180, %p181
      %s184 = sadd.s32 %s183, 1
      %p187 = scmp.eq.s32.totalorder %s23, 1
      %p188 = scmp.ne.s32.totalorder %s183, %s185
      %p189 = scmp.eq.s32.totalorder %s23, 0
      %p190 = por %p188, %p189
      %p191 = scmp.ne.s32.totalorder %s183, %s185
      %p192 = scmp.eq.s32.totalorder %s28, 1
      %p193 = por %p191, %p192
      %p194 = scmp.ne.s32.totalorder %s185, %s186
      %p195 = scmp.eq.s32.totalorder %s28, 0
      %p196 = por %p194, %p195
      %p197 = scmp.ne.s32.totalorder %s185, %s186
      %p198 = scmp.eq.s32.totalorder %s29, 1
      %p199 = por %p197, %p198
      %p201 = scmp.ne.s32.totalorder %s186, %s200
      %p202 = scmp.eq.s32.totalorder %s29, 0
      %p203 = por %p201, %p202
      %s205 = sadd.s32 %s204, 1
      %p208 = scmp.eq.s32.totalorder %s23, 1
      %p209 = scmp.ne.s32.totalorder %s204, %s206
      %p210 = scmp.eq.s32.totalorder %s23, 0
      %p211 = por %p209, %p210
      %p212 = scmp.ne.s32.totalorder %s204, %s206
      %p213 = scmp.eq.s32.totalorder %s28, 1
      %p214 = por %p212, %p213
      %p215 = scmp.ne.s32.totalorder %s206, %s207
      %p216 = scmp.eq.s32.totalorder %s28, 0
      %p217 = por %p215, %p216
      %p218 = scmp.ne.s32.totalorder %s206, %s207
      %p219 = scmp.eq.s32.totalorder %s29, 1
      %p220 = por %p218, %p219
      %p222 = scmp.ne.s32.totalorder %s207, %s221
      %p223 = scmp.eq.s32.totalorder %s29, 0
      %p224 = por %p222, %p223
      %s226 = sadd.s32 %s225, 1
      %p229 = scmp.eq.s32.totalorder %s23, 1
      %p230 = scmp.ne.s32.totalorder %s225, %s227
      %p231 = scmp.eq.s32.totalorder %s23, 0
      %p232 = por %p230, %p231
      %p233 = scmp.ne.s32.totalorder %s225, %s227
      %p234 = scmp.eq.s32.totalorder %s28, 1
      %p235 = por %p233, %p234
      %p236 = scmp.ne.s32.totalorder %s227, %s228
      %p237 = scmp.eq.s32.totalorder %s28, 0
      %p238 = por %p236, %p237
      %p239 = scmp.ne.s32.totalorder %s227, %s228
      %p240 = scmp.eq.s32.totalorder %s29, 1
      %p241 = por %p239, %p240
      %p243 = scmp.ne.s32.totalorder %s228, %s242
      %p244 = scmp.eq.s32.totalorder %s29, 0
      %p245 = por %p243, %p244
      %s247 = sadd.s32 %s246, 1
      %p250 = scmp.eq.s32.totalorder %s23, 1
      %p251 = scmp.ne.s32.totalorder %s246, %s248
      %p252 = scmp.eq.s32.totalorder %s23, 0
      %p253 = por %p251, %p252
      %p254 = scmp.ne.s32.totalorder %s246, %s248
      %p255 = scmp.eq.s32.totalorder %s28, 1
      %p256 = por %p254, %p255
      %p257 = scmp.ne.s32.totalorder %s248, %s249
      %p258 = scmp.eq.s32.totalorder %s28, 0
      %p259 = por %p257, %p258
      %p260 = scmp.ne.s32.totalorder %s248, %s249
      %p261 = scmp.eq.s32.totalorder %s29, 1
      %p262 = por %p260, %p261
      %p264 = scmp.ne.s32.totalorder %s249, %s263
      %p265 = scmp.eq.s32.totalorder %s29, 0
      %p266 = por %p264, %p265
      %s268 = sadd.s32 %s267, 1
      %p271 = scmp.eq.s32.totalorder %s23, 1
      %p272 = scmp.ne.s32.totalorder %s267, %s269
      %p273 = scmp.eq.s32.totalorder %s23, 0
      %p274 = por %p272, %p273
      %p275 = scmp.ne.s32.totalorder %s267, %s269
      %p276 = scmp.eq.s32.totalorder %s28, 1
      %p277 = por %p275, %p276
      %p278 = scmp.ne.s32.totalorder %s269, %s270
      %p279 = scmp.eq.s32.totalorder %s28, 0
      %p280 = por %p278, %p279
      %p281 = scmp.ne.s32.totalorder %s269, %s270
      %p282 = scmp.eq.s32.totalorder %s29, 1
      %p283 = por %p281, %p282
      %p285 = scmp.ne.s32.totalorder %s270, %s284
      %p286 = scmp.eq.s32.totalorder %s29, 0
      %p287 = por %p285, %p286
      %s289 = sadd.s32 %s288, 1
      %p292 = scmp.eq.s32.totalorder %s23, 1
      %p293 = scmp.ne.s32.totalorder %s288, %s290
      %p294 = scmp.eq.s32.totalorder %s23, 0
      %p295 = por %p293, %p294
      %p296 = scmp.ne.s32.totalorder %s288, %s290
      %p297 = scmp.eq.s32.totalorder %s28, 1
      %p298 = por %p296, %p297
      %p299 = scmp.ne.s32.totalorder %s290, %s291
      %p300 = scmp.eq.s32.totalorder %s28, 0
      %p301 = por %p299, %p300
      %p302 = scmp.ne.s32.totalorder %s290, %s291
      %p303 = scmp.eq.s32.totalorder %s29, 1
      %p304 = por %p302, %p303
      %p306 = scmp.ne.s32.totalorder %s291, %s305
      %p307 = scmp.eq.s32.totalorder %s29, 0
      %p308 = por %p306, %p307
      %s309 = ssub.s32 %s23, %s30
      %p310 = scmp.eq.s32.totalorder %s309, 0
      %s312 = sadd.s32 %s311, 1
      %s313 = scalar_select %p310, %s311, %s312
      %p316 = pneg %p310
      %p317 = scmp.eq.s32.totalorder %s23, 1
      %p318 = por %p316, %p317
      %p319 = scmp.ne.s32.totalorder %s311, %s314
      %p320 = scmp.eq.s32.totalorder %s23, 0
      %p321 = por %p319, %p320
      %p322 = scmp.ne.s32.totalorder %s311, %s314
      %p323 = scmp.eq.s32.totalorder %s28, 1
      %p324 = por %p322, %p323
      %p325 = scmp.ne.s32.totalorder %s314, %s315
      %p326 = scmp.eq.s32.totalorder %s28, 0
      %p327 = por %p325, %p326
      %p328 = scmp.ne.s32.totalorder %s314, %s315
      %p329 = scmp.eq.s32.totalorder %s29, 1
      %p330 = por %p328, %p329
      %p332 = scmp.ne.s32.totalorder %s315, %s331
      %p333 = scmp.eq.s32.totalorder %s29, 0
      %p334 = por %p332, %p333
      %p335 = scmp.le.s32.totalorder 1, %s23
      %p336 = scmp.lt.s32.totalorder %s23, 3
      %p337 = pnand %p335, %p336
      %p338 = pneg %p337
      // Predicated region
      $region9: #{tpu_custom_call.1} parent=5 // pred_check
        _
      $region10: #{tpu_custom_call.1} parent=5 // pred_check_branch
        %340 = sbr.rel (%p337) target = $region12
      $region11: #{tpu_custom_call.1} parent=5 // pred_region
        %s341 = ssub.s32 %s23, 1
        // Predicated region
        $region13: #{tpu_custom_call.1} parent=11 // pred_check
          %p342 = pneg %p70
        $region14: #{tpu_custom_call.1} parent=11 // pred_check_branch
          %344 = sbr.rel (%p342) target = $region16
        $region15: #{tpu_custom_call.1} parent=11 // pred_region
          _
        $region16: #{tpu_custom_call.1} parent=11 // pred_fallthru
          _
        // Predicated region
        $region17: #{tpu_custom_call.1} parent=11 // pred_check
          %p345 = pneg %p91
        $region18: #{tpu_custom_call.1} parent=11 // pred_check_branch
          %347 = sbr.rel (%p345) target = $region20
        $region19: #{tpu_custom_call.1} parent=11 // pred_region
          _
        $region20: #{tpu_custom_call.1} parent=11 // pred_fallthru
          _
        // Predicated region
        $region21: #{tpu_custom_call.1} parent=11 // pred_check
          %p348 = pneg %p112
        $region22: #{tpu_custom_call.1} parent=11 // pred_check_branch
          %350 = sbr.rel (%p348) target = $region24
        $region23: #{tpu_custom_call.1} parent=11 // pred_region
          _
        $region24: #{tpu_custom_call.1} parent=11 // pred_fallthru
          _
        // Predicated region
        $region25: #{tpu_custom_call.1} parent=11 // pred_check
          %p351 = pneg %p133
        $region26: #{tpu_custom_call.1} parent=11 // pred_check_branch
          %353 = sbr.rel (%p351) target = $region28
        $region27: #{tpu_custom_call.1} parent=11 // pred_region
          _
        $region28: #{tpu_custom_call.1} parent=11 // pred_fallthru
          _
        // Predicated region
        $region29: #{tpu_custom_call.1} parent=11 // pred_check
          %p354 = pneg %p154
        $region30: #{tpu_custom_call.1} parent=11 // pred_check_branch
          %356 = sbr.rel (%p354) target = $region32
        $region31: #{tpu_custom_call.1} parent=11 // pred_region
          _
        $region32: #{tpu_custom_call.1} parent=11 // pred_fallthru
          _
        // Predicated region
        $region33: #{tpu_custom_call.1} parent=11 // pred_check
          %p357 = pneg %p175
        $region34: #{tpu_custom_call.1} parent=11 // pred_check_branch
          %359 = sbr.rel (%p357) target = $region36
        $region35: #{tpu_custom_call.1} parent=11 // pred_region
          _
        $region36: #{tpu_custom_call.1} parent=11 // pred_fallthru
          _
        // Predicated region
        $region37: #{tpu_custom_call.1} parent=11 // pred_check
          %p360 = pneg %p196
        $region38: #{tpu_custom_call.1} parent=11 // pred_check_branch
          %362 = sbr.rel (%p360) target = $region40
        $region39: #{tpu_custom_call.1} parent=11 // pred_region
          %364 = vsyncadd [#allocation3], 0
          %s365 = sshll.u32 %s7, 4
          %s366 = int_to_ptr.hbm [resolvable:$true] %s365
          %s367 = sshll.u32 [#allocation2], 4
          %s368 = int_to_ptr.vmem [resolvable:$true] %s367
          %373 = dma.hbm_to_vmem [thread:$0]  %s366, 256, %s368, [#allocation3], 64, 64, 4
        $region40: #{tpu_custom_call.1} parent=11 // pred_fallthru
          _
        // Predicated region
        $region41: #{tpu_custom_call.1} parent=11 // pred_check
          %p374 = pneg %p217
        $region42: #{tpu_custom_call.1} parent=11 // pred_check_branch
          %376 = sbr.rel (%p374) target = $region44
        $region43: #{tpu_custom_call.1} parent=11 // pred_region
          _
        $region44: #{tpu_custom_call.1} parent=11 // pred_fallthru
          _
        // Predicated region
        $region45: #{tpu_custom_call.1} parent=11 // pred_check
          %p377 = pneg %p238
        $region46: #{tpu_custom_call.1} parent=11 // pred_check_branch
          %379 = sbr.rel (%p377) target = $region48
        $region47: #{tpu_custom_call.1} parent=11 // pred_region
          _
        $region48: #{tpu_custom_call.1} parent=11 // pred_fallthru
          _
        // Predicated region
        $region49: #{tpu_custom_call.1} parent=11 // pred_check
          %p380 = pneg %p259
        $region50: #{tpu_custom_call.1} parent=11 // pred_check_branch
          %382 = sbr.rel (%p380) target = $region52
        $region51: #{tpu_custom_call.1} parent=11 // pred_region
          _
        $region52: #{tpu_custom_call.1} parent=11 // pred_fallthru
          _
        // Predicated region
        $region53: #{tpu_custom_call.1} parent=11 // pred_check
          %p383 = pneg %p280
        $region54: #{tpu_custom_call.1} parent=11 // pred_check_branch
          %385 = sbr.rel (%p383) target = $region56
        $region55: #{tpu_custom_call.1} parent=11 // pred_region
          _
        $region56: #{tpu_custom_call.1} parent=11 // pred_fallthru
          _
        // Predicated region
        $region57: #{tpu_custom_call.1} parent=11 // pred_check
          %p386 = pneg %p301
        $region58: #{tpu_custom_call.1} parent=11 // pred_check_branch
          %388 = sbr.rel (%p386) target = $region60
        $region59: #{tpu_custom_call.1} parent=11 // pred_region
          _
        $region60: #{tpu_custom_call.1} parent=11 // pred_fallthru
          _
      $region12: #{tpu_custom_call.1} parent=5 // pred_fallthru
        _
      %p389 = scmp.lt.s32.totalorder %s23, 2
      // Predicated region
      $region61: #{tpu_custom_call.1} parent=5 // pred_check
        %p390 = pneg %p389
      $region62: #{tpu_custom_call.1} parent=5 // pred_check_branch
        %392 = sbr.rel (%p390) target = $region64
      $region63: #{tpu_custom_call.1} parent=5 // pred_region
        // Predicated region
        $region65: #{tpu_custom_call.1} parent=63 // pred_check
          %p393 = pneg %p43
        $region66: #{tpu_custom_call.1} parent=63 // pred_check_branch
          %395 = sbr.rel (%p393) target = $region68
        $region67: #{tpu_custom_call.1} parent=63 // pred_region
          %p396 = scmp.lt.s32.totalorder %s23, 1
          %s397 = scalar_select %p396, %s23, 1
          %s398 = smul.addr %s397, 8
          %s399 = scalar_lea.vmem %s0, %s398
        $region68: #{tpu_custom_call.1} parent=63 // pred_fallthru
          _
      $region64: #{tpu_custom_call.1} parent=5 // pred_fallthru
        _
      %p400 = scmp.le.s32.totalorder 1, %s23
      %p401 = scmp.lt.s32.totalorder %s23, 3
      %p402 = pnand %p400, %p401
      %p403 = pneg %p402
      // Predicated region
      $region69: #{tpu_custom_call.1} parent=5 // pred_check
        _
      $region70: #{tpu_custom_call.1} parent=5 // pred_check_branch
        %405 = sbr.rel (%p402) target = $region72
      $region71: #{tpu_custom_call.1} parent=5 // pred_region
        %s406 = ssub.s32 %s23, 1
        // Predicated region
        $region73: #{tpu_custom_call.1} parent=71 // pred_check
          %p407 = pneg %p196
        $region74: #{tpu_custom_call.1} parent=71 // pred_check_branch
          %409 = sbr.rel (%p407) target = $region76
        $region75: #{tpu_custom_call.1} parent=71 // pred_region
          %411 = dma.done [#allocation3], 256
        $region76: #{tpu_custom_call.1} parent=71 // pred_fallthru
          _
        %p412 = scmp.lt.s32.totalorder %s28, 1
        %s413 = scalar_select %p412, %s28, 1
        %s414 = smul.addr %s413, 8
        %s415 = scalar_lea.vmem %s0, %s414
        %p416 = pneg %p49
        %p417 = pneg %p46
        %p418 = pneg %p70
        %p419 = pneg %p67
        %p420 = pneg %p91
        %p421 = pneg %p88
        %p422 = pneg %p112
        %p423 = pneg %p109
        %p424 = pneg %p133
        %p425 = pneg %p130
        %p426 = pneg %p154
        %p427 = pneg %p151
        %p428 = pneg %p175
        %p429 = pneg %p172
        %p430 = pneg %p196
        %p431 = pneg %p193
        %p432 = pneg %p217
        %p433 = pneg %p214
        %p434 = pneg %p238
        %p435 = pneg %p235
        %p436 = pneg %p259
        %p437 = pneg %p256
        %p438 = pneg %p280
        %p439 = pneg %p277
        %p440 = pneg %p301
        %p441 = pneg %p298
        %p442 = pneg %p327
        %p443 = pneg %p324
        %s444 = sand.u32 %s314, 1
        %s445 = scalar_lea.sflag [#allocation4], %s444
        %s446 = sand.u32 %s314, 1
        %s447 = smul.addr %s446, 8
        %s448 = scalar_lea.vmem [#allocation5], %s447
        %p449 = scmp.lt.s32.totalorder %s28, 1
        %s450 = scalar_select %p449, %s28, 1
        %s451 = smul.addr %s450, 8
        %s452 = scalar_lea.vmem %s0, %s451
        %v454 = vld [vmem:[%s452] sm:$0xff]
        %v455 = vpack.c.bf16 %v454, %v454
        %v456 = vld [vmem:[%s1] sm:$0xf]
        %v457 = vld [vmem:[%s1 + $0x4] sm:$0xf]
        %v458 = vld [vmem:[%s1 + $0x8] sm:$0xf]
        %v459 = vld [vmem:[%s1 + $0xc] sm:$0xf]
        %v460 = vld [vmem:[%s2] sm:$0x1]
        %v462 = vperm.slane %v460, 0
        %v468 = vunpack.c.l.b16 %v456
        %v469 = vunpack.c.l.b16 %v457
        %v470 = vunpack.c.l.b16 %v458
        %v471 = vunpack.c.l.b16 %v459
        %v472 = vpack.c.b16 %v469, %v468
        %v473 = vpack.c.b16 %v471, %v470
        %vm476 = vcmask 261120
        %v478 = vsel %vm476, %v455, 0
        %480 = vmatpush.bf16.msra.mxu0 0
        %481 = vmatpush.bf16.msra.mxu0 0
        %482 = vmatpush.bf16.msra.mxu0 0
        %483 = vmatpush.bf16.msra.mxu0 0
        %484 = vmatpush.bf16.msra.mxu0 0
        %485 = vmatpush.bf16.msra.mxu0 0
        %486 = vmatpush.bf16.msra.mxu0 %v473
        %487 = vmatpush.bf16.msra.mxu0 %v472
        %488 = vmatmul.bf16.gmra.mxu0 %v478
        %v489 = vpop.f32.mrf.mxu0
        %v490 = vadd.f32 %v462, %v489
        %v491 = vpop.f32.mrf.mxu0
        %492 = vdwg.mxu0
        %v493 = vld [vmem:[%s3] sm:$0xf]
        %v494 = vld [vmem:[%s3 + $0x4] sm:$0xf]
        %v495 = vld [vmem:[%s3 + $0x8] sm:$0xf]
        %v496 = vld [vmem:[%s3 + $0xc] sm:$0xf]
        %v497 = vpack.c.bf16 %v490, %v490
        %499 = vrot.lane.b32.xlu0 %v497, 96
        %v500 = vpop.permute.xlu0 %499
        %vm501 = vcmask 64512
        %v503 = vsel %vm501, %v497, 0
        %v506 = vsel %vm501, %v500, 0
        %508 = vmatpush.bf16.xpose.msra.mxu0 0
        %509 = vmatpush.bf16.xpose.msra.mxu0 0
        %510 = vmatpush.bf16.xpose.msra.mxu0 0
        %511 = vmatpush.bf16.xpose.msra.mxu0 0
        %512 = vmatpush.bf16.xpose.msra.mxu0 0
        %513 = vmatpush.bf16.xpose.msra.mxu0 0
        %514 = vmatpush.bf16.xpose.msra.mxu0 0
        %515 = vmatpush.bf16.xpose.msra.mxu0 %v506
        %516 = vmatmul.bf16.gmra.mxu0 %v503
        %v517 = vpop.f32.mrf.mxu0
        %v518 = vadd.f32 0.0, %v517
        %v519 = vpop.f32.mrf.mxu0
        %520 = vdwg.mxu0
        %v521 = vsel %vm501, %v518, -inf
        %522 = vmax.xlane.f32.xlu0 %v521
        %v523 = vpop.xlane.xlu0 %522
        %v524 = vsub.f32 %v518, %v523
        %v525 = vmul.f32 %v524, 1.442695
        %v526 = vpow.pop %v525
        %v527 = vsel %vm501, %v526, 0.0
        %528 = vadd.xlane.f32.xlu0 %v527
        %v529 = vpop.xlane.xlu0 %528
        %v530 = vrcp.pop %v529
        %v531 = vmul.f32 %v526, %v530
        %v532 = vpack.c.bf16 %v531, %v531
        %533 = vrot.lane.b32.xlu0 %v497, 64
        %v534 = vpop.permute.xlu0 %533
        %v536 = vsel %vm501, %v532, 0
        %vm538 = vcmask 1043456
        %v540 = vsel %vm538, %v534, 0
        %542 = vmatpush.bf16.msra.mxu0 0
        %543 = vmatpush.bf16.msra.mxu0 0
        %544 = vmatpush.bf16.msra.mxu0 0
        %545 = vmatpush.bf16.msra.mxu0 0
        %546 = vmatpush.bf16.msra.mxu0 0
        %547 = vmatpush.bf16.msra.mxu0 0
        %548 = vmatpush.bf16.msra.mxu0 0
        %549 = vmatpush.bf16.msra.mxu0 %v540
        %550 = vmatmul.bf16.gmra.mxu0 %v536
        %v551 = vpop.f32.mrf.mxu0
        %v552 = vadd.f32 0.0, %v551
        %v553 = vpop.f32.mrf.mxu0
        %554 = vdwg.mxu0
        %v555 = vpack.c.bf16 %v552, %v552
        %556 = vrot.lane.b32.xlu0 %v497, 120
        %v557 = vpop.permute.xlu0 %556
        %558 = vrot.lane.b32.xlu0 %v497, 88
        %v559 = vpop.permute.xlu0 %558
        %v561 = vsel %vm501, %v557, 0
        %v564 = vsel %vm501, %v559, 0
        %566 = vmatpush.bf16.xpose.msra.mxu0 0
        %567 = vmatpush.bf16.xpose.msra.mxu0 0
        %568 = vmatpush.bf16.xpose.msra.mxu0 0
        %569 = vmatpush.bf16.xpose.msra.mxu0 0
        %570 = vmatpush.bf16.xpose.msra.mxu0 0
        %571 = vmatpush.bf16.xpose.msra.mxu0 0
        %572 = vmatpush.bf16.xpose.msra.mxu0 0
        %573 = vmatpush.bf16.xpose.msra.mxu0 %v564
        %574 = vmatmul.bf16.gmra.mxu0 %v561
        %v575 = vpop.f32.mrf.mxu0
        %v576 = vadd.f32 0.0, %v575
        %v577 = vpop.f32.mrf.mxu0
        %578 = vdwg.mxu0
        %v579 = vsel %vm501, %v576, -inf
        %580 = vmax.xlane.f32.xlu0 %v579
        %v581 = vpop.xlane.xlu0 %580
        %v582 = vsub.f32 %v576, %v581
        %v583 = vmul.f32 %v582, 1.442695
        %v584 = vpow.pop %v583
        %v585 = vsel %vm501, %v584, 0.0
        %586 = vadd.xlane.f32.xlu0 %v585
        %v587 = vpop.xlane.xlu0 %586
        %v588 = vrcp.pop %v587
        %v589 = vmul.f32 %v584, %v588
        %v590 = vpack.c.bf16 %v589, %v589
        %591 = vrot.lane.b32.xlu0 %v497, 56
        %v592 = vpop.permute.xlu0 %591
        %v594 = vsel %vm501, %v590, 0
        %v597 = vsel %vm538, %v592, 0
        %599 = vmatpush.bf16.msra.mxu0 0
        %600 = vmatpush.bf16.msra.mxu0 0
        %601 = vmatpush.bf16.msra.mxu0 0
        %602 = vmatpush.bf16.msra.mxu0 0
        %603 = vmatpush.bf16.msra.mxu0 0
        %604 = vmatpush.bf16.msra.mxu0 0
        %605 = vmatpush.bf16.msra.mxu0 0
        %606 = vmatpush.bf16.msra.mxu0 %v597
        %607 = vmatmul.bf16.gmra.mxu0 %v594
        %v608 = vpop.f32.mrf.mxu0
        %v609 = vadd.f32 0.0, %v608
        %v610 = vpop.f32.mrf.mxu0
        %611 = vdwg.mxu0
        %v612 = vpack.c.bf16 %v609, %v609
        %v614 = vsel %vm501, %v612, 0
        %v617 = vsel %vm538, %v494, 0
        %619 = vmatpush.bf16.msra.mxu0 0
        %620 = vmatpush.bf16.msra.mxu0 0
        %621 = vmatpush.bf16.msra.mxu0 0
        %622 = vmatpush.bf16.msra.mxu0 0
        %623 = vmatpush.bf16.msra.mxu0 0
        %624 = vmatpush.bf16.msra.mxu0 0
        %625 = vmatpush.bf16.msra.mxu0 0
        %626 = vmatpush.bf16.msra.mxu0 %v617
        %627 = vmatmul.bf16.gmra.mxu0 %v614
        %v628 = vpop.f32.mrf.mxu0
        %v629 = vadd.f32 0.0, %v628
        %v630 = vpop.f32.mrf.mxu0
        %631 = vdwg.mxu0
        %v633 = vsel %vm501, %v555, 0
        %v636 = vsel %vm538, %v493, 0
        %638 = vmatpush.bf16.msra.mxu0 0
        %639 = vmatpush.bf16.msra.mxu0 0
        %640 = vmatpush.bf16.msra.mxu0 0
        %641 = vmatpush.bf16.msra.mxu0 0
        %642 = vmatpush.bf16.msra.mxu0 0
        %643 = vmatpush.bf16.msra.mxu0 0
        %644 = vmatpush.bf16.msra.mxu0 0
        %645 = vmatpush.bf16.msra.mxu0 %v636
        %646 = vmatmul.bf16.gmra.mxu0 %v633
        %v647 = vpop.f32.mrf.mxu0
        %v648 = vadd.f32 %v629, %v647
        %v649 = vpop.f32.mrf.mxu0
        %650 = vdwg.mxu0
        %651 = vrot.lane.b32.xlu0 %v497, 112
        %v652 = vpop.permute.xlu0 %651
        %653 = vrot.lane.b32.xlu0 %v497, 80
        %v654 = vpop.permute.xlu0 %653
        %v656 = vsel %vm501, %v652, 0
        %v659 = vsel %vm501, %v654, 0
        %661 = vmatpush.bf16.xpose.msra.mxu0 0
        %662 = vmatpush.bf16.xpose.msra.mxu0 0
        %663 = vmatpush.bf16.xpose.msra.mxu0 0
        %664 = vmatpush.bf16.xpose.msra.mxu0 0
        %665 = vmatpush.bf16.xpose.msra.mxu0 0
        %666 = vmatpush.bf16.xpose.msra.mxu0 0
        %667 = vmatpush.bf16.xpose.msra.mxu0 0
        %668 = vmatpush.bf16.xpose.msra.mxu0 %v659
        %669 = vmatmul.bf16.gmra.mxu0 %v656
        %v670 = vpop.f32.mrf.mxu0
        %v671 = vadd.f32 0.0, %v670
        %v672 = vpop.f32.mrf.mxu0
        %673 = vdwg.mxu0
        %v674 = vsel %vm501, %v671, -inf
        %675 = vmax.xlane.f32.xlu0 %v674
        %v676 = vpop.xlane.xlu0 %675
        %v677 = vsub.f32 %v671, %v676
        %v678 = vmul.f32 %v677, 1.442695
        %v679 = vpow.pop %v678
        %v680 = vsel %vm501, %v679, 0.0
        %681 = vadd.xlane.f32.xlu0 %v680
        %v682 = vpop.xlane.xlu0 %681
        %v683 = vrcp.pop %v682
        %v684 = vmul.f32 %v679, %v683
        %v685 = vpack.c.bf16 %v684, %v684
        %686 = vrot.lane.b32.xlu0 %v497, 48
        %v687 = vpop.permute.xlu0 %686
        %v689 = vsel %vm501, %v685, 0
        %v692 = vsel %vm538, %v687, 0
        %694 = vmatpush.bf16.msra.mxu0 0
        %695 = vmatpush.bf16.msra.mxu0 0
        %696 = vmatpush.bf16.msra.mxu0 0
        %697 = vmatpush.bf16.msra.mxu0 0
        %698 = vmatpush.bf16.msra.mxu0 0
        %699 = vmatpush.bf16.msra.mxu0 0
        %700 = vmatpush.bf16.msra.mxu0 0
        %701 = vmatpush.bf16.msra.mxu0 %v692
        %702 = vmatmul.bf16.gmra.mxu0 %v689
        %v703 = vpop.f32.mrf.mxu0
        %v704 = vadd.f32 0.0, %v703
        %v705 = vpop.f32.mrf.mxu0
        %706 = vdwg.mxu0
        %v707 = vpack.c.bf16 %v704, %v704
        %v709 = vsel %vm501, %v707, 0
        %v712 = vsel %vm538, %v495, 0
        %714 = vmatpush.bf16.msra.mxu0 0
        %715 = vmatpush.bf16.msra.mxu0 0
        %716 = vmatpush.bf16.msra.mxu0 0
        %717 = vmatpush.bf16.msra.mxu0 0
        %718 = vmatpush.bf16.msra.mxu0 0
        %719 = vmatpush.bf16.msra.mxu0 0
        %720 = vmatpush.bf16.msra.mxu0 0
        %721 = vmatpush.bf16.msra.mxu0 %v712
        %722 = vmatmul.bf16.gmra.mxu0 %v709
        %v723 = vpop.f32.mrf.mxu0
        %v724 = vadd.f32 0.0, %v723
        %v725 = vpop.f32.mrf.mxu0
        %726 = vdwg.mxu0
        %v727 = vadd.f32 %v648, %v724
        %728 = vrot.lane.b32.xlu0 %v497, 104
        %v729 = vpop.permute.xlu0 %728
        %730 = vrot.lane.b32.xlu0 %v497, 72
        %v731 = vpop.permute.xlu0 %730
        %v733 = vsel %vm501, %v729, 0
        %v736 = vsel %vm501, %v731, 0
        %738 = vmatpush.bf16.xpose.msra.mxu0 0
        %739 = vmatpush.bf16.xpose.msra.mxu0 0
        %740 = vmatpush.bf16.xpose.msra.mxu0 0
        %741 = vmatpush.bf16.xpose.msra.mxu0 0
        %742 = vmatpush.bf16.xpose.msra.mxu0 0
        %743 = vmatpush.bf16.xpose.msra.mxu0 0
        %744 = vmatpush.bf16.xpose.msra.mxu0 0
        %745 = vmatpush.bf16.xpose.msra.mxu0 %v736
        %746 = vmatmul.bf16.gmra.mxu0 %v733
        %v747 = vpop.f32.mrf.mxu0
        %v748 = vadd.f32 0.0, %v747
        %v749 = vpop.f32.mrf.mxu0
        %750 = vdwg.mxu0
        %v751 = vsel %vm501, %v748, -inf
        %752 = vmax.xlane.f32.xlu0 %v751
        %v753 = vpop.xlane.xlu0 %752
        %v754 = vsub.f32 %v748, %v753
        %v755 = vmul.f32 %v754, 1.442695
        %v756 = vpow.pop %v755
        %v757 = vsel %vm501, %v756, 0.0
        %758 = vadd.xlane.f32.xlu0 %v757
        %v759 = vpop.xlane.xlu0 %758
        %v760 = vrcp.pop %v759
        %v761 = vmul.f32 %v756, %v760
        %v762 = vpack.c.bf16 %v761, %v761
        %763 = vrot.lane.b32.xlu0 %v497, 40
        %v764 = vpop.permute.xlu0 %763
        %v766 = vsel %vm501, %v762, 0
        %v769 = vsel %vm538, %v764, 0
        %771 = vmatpush.bf16.msra.mxu0 0
        %772 = vmatpush.bf16.msra.mxu0 0
        %773 = vmatpush.bf16.msra.mxu0 0
        %774 = vmatpush.bf16.msra.mxu0 0
        %775 = vmatpush.bf16.msra.mxu0 0
        %776 = vmatpush.bf16.msra.mxu0 0
        %777 = vmatpush.bf16.msra.mxu0 0
        %778 = vmatpush.bf16.msra.mxu0 %v769
        %779 = vmatmul.bf16.gmra.mxu0 %v766
        %v780 = vpop.f32.mrf.mxu0
        %v781 = vadd.f32 0.0, %v780
        %v782 = vpop.f32.mrf.mxu0
        %783 = vdwg.mxu0
        %v784 = vpack.c.bf16 %v781, %v781
        %v786 = vsel %vm501, %v784, 0
        %v789 = vsel %vm538, %v496, 0
        %791 = vmatpush.bf16.msra.mxu0 0
        %792 = vmatpush.bf16.msra.mxu0 0
        %793 = vmatpush.bf16.msra.mxu0 0
        %794 = vmatpush.bf16.msra.mxu0 0
        %795 = vmatpush.bf16.msra.mxu0 0
        %796 = vmatpush.bf16.msra.mxu0 0
        %797 = vmatpush.bf16.msra.mxu0 0
        %798 = vmatpush.bf16.msra.mxu0 %v789
        %799 = vmatmul.bf16.gmra.mxu0 %v786
        %v800 = vpop.f32.mrf.mxu0
        %v801 = vadd.f32 0.0, %v800
        %v802 = vpop.f32.mrf.mxu0
        %803 = vdwg.mxu0
        %v804 = vadd.f32 %v727, %v801
        %v805 = vld [vmem:[%s4] sm:$0x1]
        %v807 = vperm.slane %v805, 0
        %v809 = vadd.f32 %v804, %v807
        %v810 = vadd.f32 %v454, %v809
        %v811 = vld [vmem:[%s5] sm:$0x1]
        %v812 = vld [vmem:[%s6] sm:$0x1]
        %v813 = vsel %vm476, %v810, 0.0
        %814 = vadd.xlane.f32.xlu0 %v813
        %v815 = vpop.xlane.xlu0 %814
        %v816 = vrcp.pop 32.0
        %v817 = vmul.f32 32.0, %v816
        %v818 = vsub.f32 1.0, %v817
        %v819 = vmul.f32 %v816, %v818
        %v820 = vadd.f32 %v816, %v819
        %vm821 = vweird.f32 %v816
        %v822 = vsel %vm821, %v816, %v820
        %v823 = vmul.f32 %v815, %v822
        %v824 = vsub.f32 %v810, %v823
        %v825 = vmul.f32 %v824, %v824
        %v826 = vsel %vm476, %v825, 0.0
        %827 = vadd.xlane.f32.xlu0 %v826
        %v828 = vpop.xlane.xlu0 %827
        %v829 = vmul.f32 %v828, %v822
        %v830 = vadd.f32 %v829, 1e-05
        %v831 = vrsqrt.pop %v830
        %v832 = vmul.f32 %v831, %v830
        %v833 = vmul.f32 %v832, %v831
        %v834 = vmul.f32 0.5, %v833
        %v835 = vsub.f32 1.5, %v834
        %v836 = vmul.f32 %v831, %v835
        %vm837 = vweird.f32 %v830
        %vm838 = vweird.f32 %v831
        %vm839 = vmor %vm837, %vm838
        %v840 = vsel %vm839, %v831, %v836
        %v841 = vmul.f32 %v824, %v840
        %v843 = vperm.slane %v811, 0
        %v845 = vmul.f32 %v841, %v843
        %v847 = vperm.slane %v812, 0
        %v849 = vadd.f32 %v845, %v847
        %v850 = vpack.c.bf16 %v849, %v849
        %v851 = vld [vmem:[#allocation2] sm:$0xf]
        %v852 = vld [vmem:[#allocation2 + $0x4] sm:$0xf]
        %v853 = vld [vmem:[#allocation2 + $0x8] sm:$0xf]
        %v854 = vld [vmem:[#allocation2 + $0xc] sm:$0xf]
        %v855 = vld [vmem:[%s8] sm:$0x1]
        %v857 = vperm.slane %v855, 0
        %v863 = vunpack.c.l.b16 %v851
        %v864 = vunpack.c.l.b16 %v852
        %v865 = vunpack.c.l.b16 %v853
        %v866 = vunpack.c.l.b16 %v854
        %v867 = vpack.c.b16 %v864, %v863
        %v868 = vpack.c.b16 %v866, %v865
        %v872 = vsel %vm476, %v850, 0
        %874 = vmatpush.bf16.msra.mxu0 0
        %875 = vmatpush.bf16.msra.mxu0 0
        %876 = vmatpush.bf16.msra.mxu0 0
        %877 = vmatpush.bf16.msra.mxu0 0
        %878 = vmatpush.bf16.msra.mxu0 0
        %879 = vmatpush.bf16.msra.mxu0 0
        %880 = vmatpush.bf16.msra.mxu0 %v868
        %881 = vmatpush.bf16.msra.mxu0 %v867
        %882 = vmatmul.bf16.gmra.mxu0 %v872
        %v883 = vpop.f32.mrf.mxu0
        %v884 = vadd.f32 %v857, %v883
        %v885 = vpop.f32.mrf.mxu0
        %886 = vdwg.mxu0
        %v887 = vmax.f32 %v884, 0.0
        %v888 = vpack.c.bf16 %v887, %v887
        %v889 = vld [vmem:[%s9] sm:$0xf]
        %v890 = vld [vmem:[%s9 + $0x4] sm:$0xf]
        %v891 = vld [vmem:[%s9 + $0x8] sm:$0xf]
        %v892 = vld [vmem:[%s9 + $0xc] sm:$0xf]
        %v893 = vld [vmem:[%s9 + $0x10] sm:$0xf]
        %v894 = vld [vmem:[%s9 + $0x14] sm:$0xf]
        %v895 = vld [vmem:[%s9 + $0x18] sm:$0xf]
        %v896 = vld [vmem:[%s9 + $0x1c] sm:$0xf]
        %v897 = vld [vmem:[%s10] sm:$0x1]
        %v899 = vperm.slane %v897, 0
        %v909 = vunpack.c.l.b16 %v889
        %v910 = vunpack.c.l.b16 %v890
        %v911 = vunpack.c.l.b16 %v891
        %v912 = vunpack.c.l.b16 %v892
        %v913 = vunpack.c.l.b16 %v893
        %v914 = vunpack.c.l.b16 %v894
        %v915 = vunpack.c.l.b16 %v895
        %v916 = vunpack.c.l.b16 %v896
        %v917 = vpack.c.b16 %v910, %v909
        %v918 = vpack.c.b16 %v912, %v911
        %v919 = vpack.c.b16 %v914, %v913
        %v920 = vpack.c.b16 %v916, %v915
        %vm925 = vcmask 523264
        %v927 = vsel %vm925, %v888, 0
        %929 = vmatpush.bf16.msra.mxu0 0
        %930 = vmatpush.bf16.msra.mxu0 0
        %931 = vmatpush.bf16.msra.mxu0 0
        %932 = vmatpush.bf16.msra.mxu0 0
        %933 = vmatpush.bf16.msra.mxu0 %v920
        %934 = vmatpush.bf16.msra.mxu0 %v919
        %935 = vmatpush.bf16.msra.mxu0 %v918
        %936 = vmatpush.bf16.msra.mxu0 %v917
        %937 = vmatmul.bf16.gmra.mxu0 %v927
        %v938 = vpop.f32.mrf.mxu0
        %v939 = vadd.f32 %v899, %v938
        %v940 = vpop.f32.mrf.mxu0
        %941 = vdwg.mxu0
        %v942 = vadd.f32 %v849, %v939
        %v943 = vld [vmem:[%s11] sm:$0x1]
        %v944 = vld [vmem:[%s12] sm:$0x1]
        %v945 = vsel %vm476, %v942, 0.0
        %946 = vadd.xlane.f32.xlu0 %v945
        %v947 = vpop.xlane.xlu0 %946
        %v948 = vmul.f32 %v947, %v822
        %v949 = vsub.f32 %v942, %v948
        %v950 = vmul.f32 %v949, %v949
        %v951 = vsel %vm476, %v950, 0.0
        %952 = vadd.xlane.f32.xlu0 %v951
        %v953 = vpop.xlane.xlu0 %952
        %v954 = vmul.f32 %v953, %v822
        %v955 = vadd.f32 %v954, 1e-05
        %v956 = vrsqrt.pop %v955
        %v957 = vmul.f32 %v956, %v955
        %v958 = vmul.f32 %v957, %v956
        %v959 = vmul.f32 0.5, %v958
        %v960 = vsub.f32 1.5, %v959
        %v961 = vmul.f32 %v956, %v960
        %vm962 = vweird.f32 %v955
        %vm963 = vweird.f32 %v956
        %vm964 = vmor %vm962, %vm963
        %v965 = vsel %vm964, %v956, %v961
        %v966 = vmul.f32 %v949, %v965
        %v968 = vperm.slane %v943, 0
        %v970 = vmul.f32 %v966, %v968
        %v972 = vperm.slane %v944, 0
        %v974 = vadd.f32 %v970, %v972
        %975 = vst.msk [vmem:[%s448] sm:$0xff] %vm476, %v974
        %s976 = sand.u32 %s314, 1
        %s977 = scalar_lea.sflag [#allocation4], %s976
        %s978 = sand.u32 %s314, 1
        %s979 = smul.addr %s978, 8
        %s980 = scalar_lea.vmem [#allocation5], %s979
        // Predicated region
        $region77: #{tpu_custom_call.1} parent=71 // pred_check
          %p981 = pneg %p324
        $region78: #{tpu_custom_call.1} parent=71 // pred_check_branch
          %983 = sbr.rel (%p981) target = $region80
        $region79: #{tpu_custom_call.1} parent=71 // pred_region
          %985 = vsyncadd %s977, 0
          %s986 = smul.addr %s28, 8
          %s987 = scalar_lea.hbm %s13, %s986
          %s989 = sshll.u32 %s980, 4
          %s990 = int_to_ptr.vmem [resolvable:$true] %s989
          %s991 = sshll.u32 %s987, 4
          %s992 = int_to_ptr.hbm [resolvable:$true] %s991
          %994 = dma.vmem_to_hbm [thread:$0]  %s990, 128, %s992, %s977
        $region80: #{tpu_custom_call.1} parent=71 // pred_fallthru
          _
      $region72: #{tpu_custom_call.1} parent=5 // pred_fallthru
        _
      %p995 = scmp.le.s32.totalorder 2, %s23
      // Predicated region
      $region81: #{tpu_custom_call.1} parent=5 // pred_check
        %p996 = pneg %p995
      $region82: #{tpu_custom_call.1} parent=5 // pred_check_branch
        %998 = sbr.rel (%p996) target = $region84
      $region83: #{tpu_custom_call.1} parent=5 // pred_region
        %s999 = ssub.s32 %s23, 2
        // Predicated region
        $region85: #{tpu_custom_call.1} parent=83 // pred_check
          %p1000 = pneg %p330
        $region86: #{tpu_custom_call.1} parent=83 // pred_check_branch
          %1002 = sbr.rel (%p1000) target = $region88
        $region87: #{tpu_custom_call.1} parent=83 // pred_region
          %s1003 = sand.u32 %s315, 1
          %s1004 = scalar_lea.sflag [#allocation4], %s1003
          %s1005 = sand.u32 %s315, 1
          %s1006 = smul.addr %s1005, 8
          %s1007 = scalar_lea.vmem [#allocation5], %s1006
          %1009 = dma.done %s1004, 128
        $region88: #{tpu_custom_call.1} parent=83 // pred_fallthru
          _
      $region84: #{tpu_custom_call.1} parent=5 // pred_fallthru
        _
    $region6: #{tpu_custom_call.1} parent=1 // loop_footer
      %s27 = sadd.s32 1, %s23
    $region7: #{tpu_custom_call.1} parent=1 // loop_footer_branch
      %22 = sbr.rel target = $region3
    $region8: #{tpu_custom_call.1} parent=1 // loop_exit
      _
    %1010 = vsyncpa [#allocation3], 1
    %s1011 = scalar_lea.sflag [#allocation3], 1
    %1012 = vsyncpa %s1011, 1
    %1013 = vsyncpa [#allocation4], 1
    %s1014 = scalar_lea.sflag [#allocation4], 1
    %1015 = vsyncpa %s1014, 1

// kernel: tpu_custom_call.1
$region0: #{tpu_custom_call.1}
  #allocation0 [shape = 'u32[]', space=smem, size = 0x4, offset = 0x4, fixed_abs, tag = 'smem constant byte address 0x4 - core index']
  #allocation1 [shape = 'u32[72,128]{1,0:T(1,128)}', space=vmem, size = 0x9000, scoped, tag = 'internal scratch']
  %s0 = inlined_call_operand.vmem [shape: f32[2,8,32], index: 0, kind: input, shape index: {}]
  %s1 = inlined_call_operand.vmem [shape: bf16[32,96], index: 1, kind: input, shape index: {}]
  %s2 = inlined_call_operand.vmem [shape: f32[1,96], index: 2, kind: input, shape index: {}]
  %s3 = inlined_call_operand.vmem [shape: bf16[32,32], index: 3, kind: input, shape index: {}]
  %s4 = inlined_call_operand.vmem [shape: f32[1,32], index: 4, kind: input, shape index: {}]
  %s5 = inlined_call_operand.vmem [shape: f32[1,32], index: 5, kind: input, shape index: {}]
  %s6 = inlined_call_operand.vmem [shape: f32[1,32], index: 6, kind: input, shape index: {}]
  %s7 = inlined_call_operand.hbm [shape: bf16[32,64], index: 7, kind: input, shape index: {}]
  %s8 = inlined_call_operand.vmem [shape: f32[1,64], index: 8, kind: input, shape index: {}]
  %s9 = inlined_call_operand.vmem [shape: bf16[64,32], index: 9, kind: input, shape index: {}]
  %s10 = inlined_call_operand.vmem [shape: f32[1,32], index: 10, kind: input, shape index: {}]
  %s11 = inlined_call_operand.vmem [shape: f32[1,32], index: 11, kind: input, shape index: {}]
  %s12 = inlined_call_operand.vmem [shape: f32[1,32], index: 12, kind: input, shape index: {}]
  %s13 = inlined_call_operand.hbm [shape: f32[2,8,32], index: 13, kind: output, shape index: {}]
  %s14 = sld [smem:[#allocation0]]
  $region89: #{tpu_custom_call.1} parent=0
    _
  %s16 = ssub.s32 1, %s14
  %s17 = scalar_select 0, %s16, %s14
  $region1: #{tpu_custom_call.1} parent=0
    #allocation2 [shape = 'u8[8192]{0}', space=vmem, size = 0x2000, scoped, tag = 'input window, operand 7, single buffered']
    #allocation3 [shape = 's32[2]{0}', space=sflag, size = 0x8, scoped, tag = 'scoped memory for tpu_custom_call.1']
    #allocation4 [shape = 's32[2]{0}', space=sflag, size = 0x8, scoped, tag = 'scoped memory for tpu_custom_call.1']
    #allocation5 [shape = 'u8[8192]{0}', space=vmem, size = 0x2000, scoped, tag = 'output window, operand 0']
    %18 = vsyncpa [#allocation3], 0
    %19 = vsyncpa [#allocation4], 0
    %s20 = scalar_lea.sflag [#allocation4], 1
    %21 = vsyncpa %s20, 0
    loop: start=0, step=1, limit=4
    $region2: #{tpu_custom_call.1} parent=1 // loop_pre_header
      _
    $region3: #{tpu_custom_call.1} parent=1 // loop_header
      %s23 = sphi 0, %s27
      %p24 = scmp.ge.s32.totalorder %s23, 4
      %s33 = sphi 0, %s35
      %s36 = sphi 0, %s33
      %s37 = sphi 0, %s36
      %s53 = sphi 0, %s37
      %s57 = sphi 0, %s57
      %s59 = sphi 0, %s57
      %s60 = sphi 0, %s59
      %s74 = sphi 0, %s60
      %s78 = sphi 0, %s78
      %s80 = sphi 0, %s78
      %s81 = sphi 0, %s80
      %s95 = sphi 0, %s81
      %s99 = sphi 0, %s99
      %s101 = sphi 0, %s99
      %s102 = sphi 0, %s101
      %s116 = sphi 0, %s102
      %s120 = sphi 0, %s120
      %s122 = sphi 0, %s120
      %s123 = sphi 0, %s122
      %s137 = sphi 0, %s123
      %s141 = sphi 0, %s141
      %s143 = sphi 0, %s141
      %s144 = sphi 0, %s143
      %s158 = sphi 0, %s144
      %s162 = sphi 0, %s162
      %s164 = sphi 0, %s162
      %s165 = sphi 0, %s164
      %s179 = sphi 0, %s165
      %s183 = sphi 0, %s183
      %s185 = sphi 0, %s183
      %s186 = sphi 0, %s185
      %s200 = sphi 0, %s186
      %s204 = sphi 0, %s204
      %s206 = sphi 0, %s204
      %s207 = sphi 0, %s206
      %s221 = sphi 0, %s207
      %s225 = sphi 0, %s225
      %s227 = sphi 0, %s225
      %s228 = sphi 0, %s227
      %s242 = sphi 0, %s228
      %s246 = sphi 0, %s246
      %s248 = sphi 0, %s246
      %s249 = sphi 0, %s248
      %s263 = sphi 0, %s249
      %s267 = sphi 0, %s267
      %s269 = sphi 0, %s267
      %s270 = sphi 0, %s269
      %s284 = sphi 0, %s270
      %s288 = sphi 0, %s288
      %s290 = sphi 0, %s288
      %s291 = sphi 0, %s290
      %s305 = sphi 0, %s291
      %s311 = sphi 0, %s313
      %s314 = sphi 0, %s311
      %s315 = sphi 0, %s314
      %s331 = sphi 0, %s315
    $region4: #{tpu_custom_call.1} parent=1 // loop_header_branch
      %26 = sbr.rel (%p24) target = $region8
    $region5: #{tpu_custom_call.1} parent=1 // loop_body
      %s28 = ssub.s32 %s23, 1
      %s29 = ssub.s32 %s23, 2
      %s30 = sadd.s32 %s23, 1
      %s31 = ssub.s32 %s23, %s30
      %p32 = scmp.eq.s32.totalorder %s31, 0
      %s34 = sadd.s32 %s33, 1
      %s35 = scalar_select %p32, %s33, %s34
      %p38 = pneg %p32
      %p39 = scmp.eq.s32.totalorder %s23, 1
      %p40 = por %p38, %p39
      %p41 = scmp.ne.s32.totalorder %s33, %s36
      %p42 = scmp.eq.s32.totalorder %s23, 0
      %p43 = por %p41, %p42
      %p44 = scmp.ne.s32.totalorder %s33, %s36
      %p45 = scmp.eq.s32.totalorder %s28, 1
      %p46 = por %p44, %p45
      %p47 = scmp.ne.s32.totalorder %s36, %s37
      %p48 = scmp.eq.s32.totalorder %s28, 0
      %p49 = por %p47, %p48
      %p50 = scmp.ne.s32.totalorder %s36, %s37
      %p51 = scmp.eq.s32.totalorder %s29, 1
      %p52 = por %p50, %p51
      %p54 = scmp.ne.s32.totalorder %s37, %s53
      %p55 = scmp.eq.s32.totalorder %s29, 0
      %p56 = por %p54, %p55
      %s58 = sadd.s32 %s57, 1
      %p61 = scmp.eq.s32.totalorder %s23, 1
      %p62 = scmp.ne.s32.totalorder %s57, %s59
      %p63 = scmp.eq.s32.totalorder %s23, 0
      %p64 = por %p62, %p63
      %p65 = scmp.ne.s32.totalorder %s57, %s59
      %p66 = scmp.eq.s32.totalorder %s28, 1
      %p67 = por %p65, %p66
      %p68 = scmp.ne.s32.totalorder %s59, %s60
      %p69 = scmp.eq.s32.totalorder %s28, 0
      %p70 = por %p68, %p69
      %p71 = scmp.ne.s32.totalorder %s59, %s60
      %p72 = scmp.eq.s32.totalorder %s29, 1
      %p73 = por %p71, %p72
      %p75 = scmp.ne.s32.totalorder %s60, %s74
      %p76 = scmp.eq.s32.totalorder %s29, 0
      %p77 = por %p75, %p76
      %s79 = sadd.s32 %s78, 1
      %p82 = scmp.eq.s32.totalorder %s23, 1
      %p83 = scmp.ne.s32.totalorder %s78, %s80
      %p84 = scmp.eq.s32.totalorder %s23, 0
      %p85 = por %p83, %p84
      %p86 = scmp.ne.s32.totalorder %s78, %s80
      %p87 = scmp.eq.s32.totalorder %s28, 1
      %p88 = por %p86, %p87
      %p89 = scmp.ne.s32.totalorder %s80, %s81
      %p90 = scmp.eq.s32.totalorder %s28, 0
      %p91 = por %p89, %p90
      %p92 = scmp.ne.s32.totalorder %s80, %s81
      %p93 = scmp.eq.s32.totalorder %s29, 1
      %p94 = por %p92, %p93
      %p96 = scmp.ne.s32.totalorder %s81, %s95
      %p97 = scmp.eq.s32.totalorder %s29, 0
      %p98 = por %p96, %p97
      %s100 = sadd.s32 %s99, 1
      %p103 = scmp.eq.s32.totalorder %s23, 1
      %p104 = scmp.ne.s32.totalorder %s99, %s101
      %p105 = scmp.eq.s32.totalorder %s23, 0
      %p106 = por %p104, %p105
      %p107 = scmp.ne.s32.totalorder %s99, %s101
      %p108 = scmp.eq.s32.totalorder %s28, 1
      %p109 = por %p107, %p108
      %p110 = scmp.ne.s32.totalorder %s101, %s102
      %p111 = scmp.eq.s32.totalorder %s28, 0
      %p112 = por %p110, %p111
      %p113 = scmp.ne.s32.totalorder %s101, %s102
      %p114 = scmp.eq.s32.totalorder %s29, 1
      %p115 = por %p113, %p114
      %p117 = scmp.ne.s32.totalorder %s102, %s116
      %p118 = scmp.eq.s32.totalorder %s29, 0
      %p119 = por %p117, %p118
      %s121 = sadd.s32 %s120, 1
      %p124 = scmp.eq.s32.totalorder %s23, 1
      %p125 = scmp.ne.s32.totalorder %s120, %s122
      %p126 = scmp.eq.s32.totalorder %s23, 0
      %p127 = por %p125, %p126
      %p128 = scmp.ne.s32.totalorder %s120, %s122
      %p129 = scmp.eq.s32.totalorder %s28, 1
      %p130 = por %p128, %p129
      %p131 = scmp.ne.s32.totalorder %s122, %s123
      %p132 = scmp.eq.s32.totalorder %s28, 0
      %p133 = por %p131, %p132
      %p134 = scmp.ne.s32.totalorder %s122, %s123
      %p135 = scmp.eq.s32.totalorder %s29, 1
      %p136 = por %p134, %p135
      %p138 = scmp.ne.s32.totalorder %s123, %s137
      %p139 = scmp.eq.s32.totalorder %s29, 0
      %p140 = por %p138, %p139
      %s142 = sadd.s32 %s141, 1
      %p145 = scmp.eq.s32.totalorder %s23, 1
      %p146 = scmp.ne.s32.totalorder %s141, %s143
      %p147 = scmp.eq.s32.totalorder %s23, 0
      %p148 = por %p146, %p147
      %p149 = scmp.ne.s32.totalorder %s141, %s143
      %p150 = scmp.eq.s32.totalorder %s28, 1
      %p151 = por %p149, %p150
      %p152 = scmp.ne.s32.totalorder %s143, %s144
      %p153 = scmp.eq.s32.totalorder %s28, 0
      %p154 = por %p152, %p153
      %p155 = scmp.ne.s32.totalorder %s143, %s144
      %p156 = scmp.eq.s32.totalorder %s29, 1
      %p157 = por %p155, %p156
      %p159 = scmp.ne.s32.totalorder %s144, %s158
      %p160 = scmp.eq.s32.totalorder %s29, 0
      %p161 = por %p159, %p160
      %s163 = sadd.s32 %s162, 1
      %p166 = scmp.eq.s32.totalorder %s23, 1
      %p167 = scmp.ne.s32.totalorder %s162, %s164
      %p168 = scmp.eq.s32.totalorder %s23, 0
      %p169 = por %p167, %p168
      %p170 = scmp.ne.s32.totalorder %s162, %s164
      %p171 = scmp.eq.s32.totalorder %s28, 1
      %p172 = por %p170, %p171
      %p173 = scmp.ne.s32.totalorder %s164, %s165
      %p174 = scmp.eq.s32.totalorder %s28, 0
      %p175 = por %p173, %p174
      %p176 = scmp.ne.s32.totalorder %s164, %s165
      %p177 = scmp.eq.s32.totalorder %s29, 1
      %p178 = por %p176, %p177
      %p180 = scmp.ne.s32.totalorder %s165, %s179
      %p181 = scmp.eq.s32.totalorder %s29, 0
      %p182 = por %p180, %p181
      %s184 = sadd.s32 %s183, 1
      %p187 = scmp.eq.s32.totalorder %s23, 1
      %p188 = scmp.ne.s32.totalorder %s183, %s185
      %p189 = scmp.eq.s32.totalorder %s23, 0
      %p190 = por %p188, %p189
      %p191 = scmp.ne.s32.totalorder %s183, %s185
      %p192 = scmp.eq.s32.totalorder %s28, 1
      %p193 = por %p191, %p192
      %p194 = scmp.ne.s32.totalorder %s185, %s186
      %p195 = scmp.eq.s32.totalorder %s28, 0
      %p196 = por %p194, %p195
      %p197 = scmp.ne.s32.totalorder %s185, %s186
      %p198 = scmp.eq.s32.totalorder %s29, 1
      %p199 = por %p197, %p198
      %p201 = scmp.ne.s32.totalorder %s186, %s200
      %p202 = scmp.eq.s32.totalorder %s29, 0
      %p203 = por %p201, %p202
      %s205 = sadd.s32 %s204, 1
      %p208 = scmp.eq.s32.totalorder %s23, 1
      %p209 = scmp.ne.s32.totalorder %s204, %s206
      %p210 = scmp.eq.s32.totalorder %s23, 0
      %p211 = por %p209, %p210
      %p212 = scmp.ne.s32.totalorder %s204, %s206
      %p213 = scmp.eq.s32.totalorder %s28, 1
      %p214 = por %p212, %p213
      %p215 = scmp.ne.s32.totalorder %s206, %s207
      %p216 = scmp.eq.s32.totalorder %s28, 0
      %p217 = por %p215, %p216
      %p218 = scmp.ne.s32.totalorder %s206, %s207
      %p219 = scmp.eq.s32.totalorder %s29, 1
      %p220 = por %p218, %p219
      %p222 = scmp.ne.s32.totalorder %s207, %s221
      %p223 = scmp.eq.s32.totalorder %s29, 0
      %p224 = por %p222, %p223
      %s226 = sadd.s32 %s225, 1
      %p229 = scmp.eq.s32.totalorder %s23, 1
      %p230 = scmp.ne.s32.totalorder %s225, %s227
      %p231 = scmp.eq.s32.totalorder %s23, 0
      %p232 = por %p230, %p231
      %p233 = scmp.ne.s32.totalorder %s225, %s227
      %p234 = scmp.eq.s32.totalorder %s28, 1
      %p235 = por %p233, %p234
      %p236 = scmp.ne.s32.totalorder %s227, %s228
      %p237 = scmp.eq.s32.totalorder %s28, 0
      %p238 = por %p236, %p237
      %p239 = scmp.ne.s32.totalorder %s227, %s228
      %p240 = scmp.eq.s32.totalorder %s29, 1
      %p241 = por %p239, %p240
      %p243 = scmp.ne.s32.totalorder %s228, %s242
      %p244 = scmp.eq.s32.totalorder %s29, 0
      %p245 = por %p243, %p244
      %s247 = sadd.s32 %s246, 1
      %p250 = scmp.eq.s32.totalorder %s23, 1
      %p251 = scmp.ne.s32.totalorder %s246, %s248
      %p252 = scmp.eq.s32.totalorder %s23, 0
      %p253 = por %p251, %p252
      %p254 = scmp.ne.s32.totalorder %s246, %s248
      %p255 = scmp.eq.s32.totalorder %s28, 1
      %p256 = por %p254, %p255
      %p257 = scmp.ne.s32.totalorder %s248, %s249
      %p258 = scmp.eq.s32.totalorder %s28, 0
      %p259 = por %p257, %p258
      %p260 = scmp.ne.s32.totalorder %s248, %s249
      %p261 = scmp.eq.s32.totalorder %s29, 1
      %p262 = por %p260, %p261
      %p264 = scmp.ne.s32.totalorder %s249, %s263
      %p265 = scmp.eq.s32.totalorder %s29, 0
      %p266 = por %p264, %p265
      %s268 = sadd.s32 %s267, 1
      %p271 = scmp.eq.s32.totalorder %s23, 1
      %p272 = scmp.ne.s32.totalorder %s267, %s269
      %p273 = scmp.eq.s32.totalorder %s23, 0
      %p274 = por %p272, %p273
      %p275 = scmp.ne.s32.totalorder %s267, %s269
      %p276 = scmp.eq.s32.totalorder %s28, 1
      %p277 = por %p275, %p276
      %p278 = scmp.ne.s32.totalorder %s269, %s270
      %p279 = scmp.eq.s32.totalorder %s28, 0
      %p280 = por %p278, %p279
      %p281 = scmp.ne.s32.totalorder %s269, %s270
      %p282 = scmp.eq.s32.totalorder %s29, 1
      %p283 = por %p281, %p282
      %p285 = scmp.ne.s32.totalorder %s270, %s284
      %p286 = scmp.eq.s32.totalorder %s29, 0
      %p287 = por %p285, %p286
      %s289 = sadd.s32 %s288, 1
      %p292 = scmp.eq.s32.totalorder %s23, 1
      %p293 = scmp.ne.s32.totalorder %s288, %s290
      %p294 = scmp.eq.s32.totalorder %s23, 0
      %p295 = por %p293, %p294
      %p296 = scmp.ne.s32.totalorder %s288, %s290
      %p297 = scmp.eq.s32.totalorder %s28, 1
      %p298 = por %p296, %p297
      %p299 = scmp.ne.s32.totalorder %s290, %s291
      %p300 = scmp.eq.s32.totalorder %s28, 0
      %p301 = por %p299, %p300
      %p302 = scmp.ne.s32.totalorder %s290, %s291
      %p303 = scmp.eq.s32.totalorder %s29, 1
      %p304 = por %p302, %p303
      %p306 = scmp.ne.s32.totalorder %s291, %s305
      %p307 = scmp.eq.s32.totalorder %s29, 0
      %p308 = por %p306, %p307
      %s309 = ssub.s32 %s23, %s30
      %p310 = scmp.eq.s32.totalorder %s309, 0
      %s312 = sadd.s32 %s311, 1
      %s313 = scalar_select %p310, %s311, %s312
      %p316 = pneg %p310
      %p317 = scmp.eq.s32.totalorder %s23, 1
      %p318 = por %p316, %p317
      %p319 = scmp.ne.s32.totalorder %s311, %s314
      %p320 = scmp.eq.s32.totalorder %s23, 0
      %p321 = por %p319, %p320
      %p322 = scmp.ne.s32.totalorder %s311, %s314
      %p323 = scmp.eq.s32.totalorder %s28, 1
      %p324 = por %p322, %p323
      %p325 = scmp.ne.s32.totalorder %s314, %s315
      %p326 = scmp.eq.s32.totalorder %s28, 0
      %p327 = por %p325, %p326
      %p328 = scmp.ne.s32.totalorder %s314, %s315
      %p329 = scmp.eq.s32.totalorder %s29, 1
      %p330 = por %p328, %p329
      %p332 = scmp.ne.s32.totalorder %s315, %s331
      %p333 = scmp.eq.s32.totalorder %s29, 0
      %p334 = por %p332, %p333
      %p335 = scmp.le.s32.totalorder 1, %s23
      %p336 = scmp.lt.s32.totalorder %s23, 3
      %p337 = pnand %p335, %p336
      %p338 = pneg %p337
      // Predicated region
      $region9: #{tpu_custom_call.1} parent=5 // pred_check
        _
      $region10: #{tpu_custom_call.1} parent=5 // pred_check_branch
        %340 = sbr.rel (%p337) target = $region12
      $region11: #{tpu_custom_call.1} parent=5 // pred_region
        %s341 = ssub.s32 %s23, 1
        // Predicated region
        $region13: #{tpu_custom_call.1} parent=11 // pred_check
          %p342 = pneg %p70
        $region14: #{tpu_custom_call.1} parent=11 // pred_check_branch
          %344 = sbr.rel (%p342) target = $region16
        $region15: #{tpu_custom_call.1} parent=11 // pred_region
          _
        $region16: #{tpu_custom_call.1} parent=11 // pred_fallthru
          _
        // Predicated region
        $region17: #{tpu_custom_call.1} parent=11 // pred_check
          %p345 = pneg %p91
        $region18: #{tpu_custom_call.1} parent=11 // pred_check_branch
          %347 = sbr.rel (%p345) target = $region20
        $region19: #{tpu_custom_call.1} parent=11 // pred_region
          _
        $region20: #{tpu_custom_call.1} parent=11 // pred_fallthru
          _
        // Predicated region
        $region21: #{tpu_custom_call.1} parent=11 // pred_check
          %p348 = pneg %p112
        $region22: #{tpu_custom_call.1} parent=11 // pred_check_branch
          %350 = sbr.rel (%p348) target = $region24
        $region23: #{tpu_custom_call.1} parent=11 // pred_region
          _
        $region24: #{tpu_custom_call.1} parent=11 // pred_fallthru
          _
        // Predicated region
        $region25: #{tpu_custom_call.1} parent=11 // pred_check
          %p351 = pneg %p133
        $region26: #{tpu_custom_call.1} parent=11 // pred_check_branch
          %353 = sbr.rel (%p351) target = $region28
        $region27: #{tpu_custom_call.1} parent=11 // pred_region
          _
        $region28: #{tpu_custom_call.1} parent=11 // pred_fallthru
          _
        // Predicated region
        $region29: #{tpu_custom_call.1} parent=11 // pred_check
          %p354 = pneg %p154
        $region30: #{tpu_custom_call.1} parent=11 // pred_check_branch
          %356 = sbr.rel (%p354) target = $region32
        $region31: #{tpu_custom_call.1} parent=11 // pred_region
          _
        $region32: #{tpu_custom_call.1} parent=11 // pred_fallthru
          _
        // Predicated region
        $region33: #{tpu_custom_call.1} parent=11 // pred_check
          %p357 = pneg %p175
        $region34: #{tpu_custom_call.1} parent=11 // pred_check_branch
          %359 = sbr.rel (%p357) target = $region36
        $region35: #{tpu_custom_call.1} parent=11 // pred_region
          _
        $region36: #{tpu_custom_call.1} parent=11 // pred_fallthru
          _
        // Predicated region
        $region37: #{tpu_custom_call.1} parent=11 // pred_check
          %p360 = pneg %p196
        $region38: #{tpu_custom_call.1} parent=11 // pred_check_branch
          %362 = sbr.rel (%p360) target = $region40
        $region39: #{tpu_custom_call.1} parent=11 // pred_region
          %364 = vsyncadd [#allocation3], 0
          %s365 = sshll.u32 %s7, 4
          %s366 = int_to_ptr.hbm [resolvable:$true] %s365
          %s367 = sshll.u32 [#allocation2], 4
          %s368 = int_to_ptr.vmem [resolvable:$true] %s367
          %373 = dma.hbm_to_vmem [thread:$0]  %s366, 256, %s368, [#allocation3], 64, 64, 4
        $region40: #{tpu_custom_call.1} parent=11 // pred_fallthru
          _
        // Predicated region
        $region41: #{tpu_custom_call.1} parent=11 // pred_check
          %p374 = pneg %p217
        $region42: #{tpu_custom_call.1} parent=11 // pred_check_branch
          %376 = sbr.rel (%p374) target = $region44
        $region43: #{tpu_custom_call.1} parent=11 // pred_region
          _
        $region44: #{tpu_custom_call.1} parent=11 // pred_fallthru
          _
        // Predicated region
        $region45: #{tpu_custom_call.1} parent=11 // pred_check
          %p377 = pneg %p238
        $region46: #{tpu_custom_call.1} parent=11 // pred_check_branch
          %379 = sbr.rel (%p377) target = $region48
        $region47: #{tpu_custom_call.1} parent=11 // pred_region
          _
        $region48: #{tpu_custom_call.1} parent=11 // pred_fallthru
          _
        // Predicated region
        $region49: #{tpu_custom_call.1} parent=11 // pred_check
          %p380 = pneg %p259
        $region50: #{tpu_custom_call.1} parent=11 // pred_check_branch
          %382 = sbr.rel (%p380) target = $region52
        $region51: #{tpu_custom_call.1} parent=11 // pred_region
          _
        $region52: #{tpu_custom_call.1} parent=11 // pred_fallthru
          _
        // Predicated region
        $region53: #{tpu_custom_call.1} parent=11 // pred_check
          %p383 = pneg %p280
        $region54: #{tpu_custom_call.1} parent=11 // pred_check_branch
          %385 = sbr.rel (%p383) target = $region56
        $region55: #{tpu_custom_call.1} parent=11 // pred_region
          _
        $region56: #{tpu_custom_call.1} parent=11 // pred_fallthru
          _
        // Predicated region
        $region57: #{tpu_custom_call.1} parent=11 // pred_check
          %p386 = pneg %p301
        $region58: #{tpu_custom_call.1} parent=11 // pred_check_branch
          %388 = sbr.rel (%p386) target = $region60
        $region59: #{tpu_custom_call.1} parent=11 // pred_region
          _
        $region60: #{tpu_custom_call.1} parent=11 // pred_fallthru
          _
      $region12: #{tpu_custom_call.1} parent=5 // pred_fallthru
        _
      %p389 = scmp.lt.s32.totalorder %s23, 2
      // Predicated region
      $region61: #{tpu_custom_call.1} parent=5 // pred_check
        %p390 = pneg %p389
      $region62: #{tpu_custom_call.1} parent=5 // pred_check_branch
        %392 = sbr.rel (%p390) target = $region64
      $region63: #{tpu_custom_call.1} parent=5 // pred_region
        // Predicated region
        $region65: #{tpu_custom_call.1} parent=63 // pred_check
          %p393 = pneg %p43
        $region66: #{tpu_custom_call.1} parent=63 // pred_check_branch
          %395 = sbr.rel (%p393) target = $region68
        $region67: #{tpu_custom_call.1} parent=63 // pred_region
          %p396 = scmp.lt.s32.totalorder %s23, 1
          %s397 = scalar_select %p396, %s23, 1
          %s398 = smul.addr %s397, 8
          %s399 = scalar_lea.vmem %s0, %s398
        $region68: #{tpu_custom_call.1} parent=63 // pred_fallthru
          _
      $region64: #{tpu_custom_call.1} parent=5 // pred_fallthru
        _
      %p400 = scmp.le.s32.totalorder 1, %s23
      %p401 = scmp.lt.s32.totalorder %s23, 3
      %p402 = pnand %p400, %p401
      %p403 = pneg %p402
      // Predicated region
      $region69: #{tpu_custom_call.1} parent=5 // pred_check
        _
      $region70: #{tpu_custom_call.1} parent=5 // pred_check_branch
        %405 = sbr.rel (%p402) target = $region72
      $region71: #{tpu_custom_call.1} parent=5 // pred_region
        %s406 = ssub.s32 %s23, 1
        // Predicated region
        $region73: #{tpu_custom_call.1} parent=71 // pred_check
          %p407 = pneg %p196
        $region74: #{tpu_custom_call.1} parent=71 // pred_check_branch
          %409 = sbr.rel (%p407) target = $region76
        $region75: #{tpu_custom_call.1} parent=71 // pred_region
          %411 = dma.done [#allocation3], 256
        $region76: #{tpu_custom_call.1} parent=71 // pred_fallthru
          _
        %p412 = scmp.lt.s32.totalorder %s28, 1
        %s413 = scalar_select %p412, %s28, 1
        %s414 = smul.addr %s413, 8
        %s415 = scalar_lea.vmem %s0, %s414
        %p416 = pneg %p49
        %p417 = pneg %p46
        %p418 = pneg %p70
        %p419 = pneg %p67
        %p420 = pneg %p91
        %p421 = pneg %p88
        %p422 = pneg %p112
        %p423 = pneg %p109
        %p424 = pneg %p133
        %p425 = pneg %p130
        %p426 = pneg %p154
        %p427 = pneg %p151
        %p428 = pneg %p175
        %p429 = pneg %p172
        %p430 = pneg %p196
        %p431 = pneg %p193
        %p432 = pneg %p217
        %p433 = pneg %p214
        %p434 = pneg %p238
        %p435 = pneg %p235
        %p436 = pneg %p259
        %p437 = pneg %p256
        %p438 = pneg %p280
        %p439 = pneg %p277
        %p440 = pneg %p301
        %p441 = pneg %p298
        %p442 = pneg %p327
        %p443 = pneg %p324
        %s444 = sand.u32 %s314, 1
        %s445 = scalar_lea.sflag [#allocation4], %s444
        %s446 = sand.u32 %s314, 1
        %s447 = smul.addr %s446, 8
        %s448 = scalar_lea.vmem [#allocation5], %s447
        %p449 = scmp.lt.s32.totalorder %s28, 1
        %s450 = scalar_select %p449, %s28, 1
        %s451 = smul.addr %s450, 8
        %s452 = scalar_lea.vmem %s0, %s451
        %v454 = vld [vmem:[%s452] sm:$0xff]
        %v455 = vpack.c.bf16 %v454, %v454
        %v456 = vld [vmem:[%s1] sm:$0xf]
        %v457 = vld [vmem:[%s1 + $0x4] sm:$0xf]
        %v458 = vld [vmem:[%s1 + $0x8] sm:$0xf]
        %v459 = vld [vmem:[%s1 + $0xc] sm:$0xf]
        %v460 = vld [vmem:[%s2] sm:$0x1]
        %v462 = vperm.slane %v460, 0
        %v468 = vunpack.c.l.b16 %v456
        %v469 = vunpack.c.l.b16 %v457
        %v470 = vunpack.c.l.b16 %v458
        %v471 = vunpack.c.l.b16 %v459
        %v472 = vpack.c.b16 %v469, %v468
        %v473 = vpack.c.b16 %v471, %v470
        %vm476 = vcmask 261120
        %v478 = vsel %vm476, %v455, 0
        %480 = vmatpush.bf16.msra.mxu0 0
        %481 = vmatpush.bf16.msra.mxu0 0
        %482 = vmatpush.bf16.msra.mxu0 0
        %483 = vmatpush.bf16.msra.mxu0 0
        %484 = vmatpush.bf16.msra.mxu0 0
        %485 = vmatpush.bf16.msra.mxu0 0
        %486 = vmatpush.bf16.msra.mxu0 %v473
        %487 = vmatpush.bf16.msra.mxu0 %v472
        %488 = vmatmul.bf16.gmra.mxu0 %v478
        %v489 = vpop.f32.mrf.mxu0
        %v490 = vadd.f32 %v462, %v489
        %v491 = vpop.f32.mrf.mxu0
        %492 = vdwg.mxu0
        %v493 = vld [vmem:[%s3] sm:$0xf]
        %v494 = vld [vmem:[%s3 + $0x4] sm:$0xf]
        %v495 = vld [vmem:[%s3 + $0x8] sm:$0xf]
        %v496 = vld [vmem:[%s3 + $0xc] sm:$0xf]
        %v497 = vpack.c.bf16 %v490, %v490
        %499 = vrot.lane.b32.xlu0 %v497, 96
        %v500 = vpop.permute.xlu0 %499
        %vm501 = vcmask 64512
        %v503 = vsel %vm501, %v497, 0
        %v506 = vsel %vm501, %v500, 0
        %508 = vmatpush.bf16.xpose.msra.mxu0 0
        %509 = vmatpush.bf16.xpose.msra.mxu0 0
        %510 = vmatpush.bf16.xpose.msra.mxu0 0
        %511 = vmatpush.bf16.xpose.msra.mxu0 0
        %512 = vmatpush.bf16.xpose.msra.mxu0 0
        %513 = vmatpush.bf16.xpose.msra.mxu0 0
        %514 = vmatpush.bf16.xpose.msra.mxu0 0
        %515 = vmatpush.bf16.xpose.msra.mxu0 %v506
        %516 = vmatmul.bf16.gmra.mxu0 %v503
        %v517 = vpop.f32.mrf.mxu0
        %v518 = vadd.f32 0.0, %v517
        %v519 = vpop.f32.mrf.mxu0
        %520 = vdwg.mxu0
        %v521 = vsel %vm501, %v518, -inf
        %522 = vmax.xlane.f32.xlu0 %v521
        %v523 = vpop.xlane.xlu0 %522
        %v524 = vsub.f32 %v518, %v523
        %v525 = vmul.f32 %v524, 1.442695
        %v526 = vpow.pop %v525
        %v527 = vsel %vm501, %v526, 0.0
        %528 = vadd.xlane.f32.xlu0 %v527
        %v529 = vpop.xlane.xlu0 %528
        %v530 = vrcp.pop %v529
        %v531 = vmul.f32 %v526, %v530
        %v532 = vpack.c.bf16 %v531, %v531
        %533 = vrot.lane.b32.xlu0 %v497, 64
        %v534 = vpop.permute.xlu0 %533
        %v536 = vsel %vm501, %v532, 0
        %vm538 = vcmask 1043456
        %v540 = vsel %vm538, %v534, 0
        %542 = vmatpush.bf16.msra.mxu0 0
        %543 = vmatpush.bf16.msra.mxu0 0
        %544 = vmatpush.bf16.msra.mxu0 0
        %545 = vmatpush.bf16.msra.mxu0 0
        %546 = vmatpush.bf16.msra.mxu0 0
        %547 = vmatpush.bf16.msra.mxu0 0
        %548 = vmatpush.bf16.msra.mxu0 0
        %549 = vmatpush.bf16.msra.mxu0 %v540
        %550 = vmatmul.bf16.gmra.mxu0 %v536
        %v551 = vpop.f32.mrf.mxu0
        %v552 = vadd.f32 0.0, %v551
        %v553 = vpop.f32.mrf.mxu0
        %554 = vdwg.mxu0
        %v555 = vpack.c.bf16 %v552, %v552
        %556 = vrot.lane.b32.xlu0 %v497, 120
        %v557 = vpop.permute.xlu0 %556
        %558 = vrot.lane.b32.xlu0 %v497, 88
        %v559 = vpop.permute.xlu0 %558
        %v561 = vsel %vm501, %v557, 0
        %v564 = vsel %vm501, %v559, 0
        %566 = vmatpush.bf16.xpose.msra.mxu0 0
        %567 = vmatpush.bf16.xpose.msra.mxu0 0
        %568 = vmatpush.bf16.xpose.msra.mxu0 0
        %569 = vmatpush.bf16.xpose.msra.mxu0 0
        %570 = vmatpush.bf16.xpose.msra.mxu0 0
        %571 = vmatpush.bf16.xpose.msra.mxu0 0
        %572 = vmatpush.bf16.xpose.msra.mxu0 0
        %573 = vmatpush.bf16.xpose.msra.mxu0 %v564
        %574 = vmatmul.bf16.gmra.mxu0 %v561
        %v575 = vpop.f32.mrf.mxu0
        %v576 = vadd.f32 0.0, %v575
        %v577 = vpop.f32.mrf.mxu0
        %578 = vdwg.mxu0
        %v579 = vsel %vm501, %v576, -inf
        %580 = vmax.xlane.f32.xlu0 %v579
        %v581 = vpop.xlane.xlu0 %580
        %v582 = vsub.f32 %v576, %v581
        %v583 = vmul.f32 %v582, 1.442695
        %v584 = vpow.pop %v583
        %v585 = vsel %vm501, %v584, 0.0
        %586 = vadd.xlane.f32.xlu0 %v585
        %v587 = vpop.xlane.xlu0 %586
        %v588 = vrcp.pop %v587
        %v589 = vmul.f32 %v584, %v588
        %v590 = vpack.c.bf16 %v589, %v589
        %591 = vrot.lane.b32.xlu0 %v497, 56
        %v592 = vpop.permute.xlu0 %591
        %v594 = vsel %vm501, %v590, 0
        %v597 = vsel %vm538, %v592, 0
        %599 = vmatpush.bf16.msra.mxu0 0
        %600 = vmatpush.bf16.msra.mxu0 0
        %601 = vmatpush.bf16.msra.mxu0 0
        %602 = vmatpush.bf16.msra.mxu0 0
        %603 = vmatpush.bf16.msra.mxu0 0
        %604 = vmatpush.bf16.msra.mxu0 0
        %605 = vmatpush.bf16.msra.mxu0 0
        %606 = vmatpush.bf16.msra.mxu0 %v597
        %607 = vmatmul.bf16.gmra.mxu0 %v594
        %v608 = vpop.f32.mrf.mxu0
        %v609 = vadd.f32 0.0, %v608
        %v610 = vpop.f32.mrf.mxu0
        %611 = vdwg.mxu0
        %v612 = vpack.c.bf16 %v609, %v609
        %v614 = vsel %vm501, %v612, 0
        %v617 = vsel %vm538, %v494, 0
        %619 = vmatpush.bf16.msra.mxu0 0
        %620 = vmatpush.bf16.msra.mxu0 0
        %621 = vmatpush.bf16.msra.mxu0 0
        %622 = vmatpush.bf16.msra.mxu0 0
        %623 = vmatpush.bf16.msra.mxu0 0
        %624 = vmatpush.bf16.msra.mxu0 0
        %625 = vmatpush.bf16.msra.mxu0 0
        %626 = vmatpush.bf16.msra.mxu0 %v617
        %627 = vmatmul.bf16.gmra.mxu0 %v614
        %v628 = vpop.f32.mrf.mxu0
        %v629 = vadd.f32 0.0, %v628
        %v630 = vpop.f32.mrf.mxu0
        %631 = vdwg.mxu0
        %v633 = vsel %vm501, %v555, 0
        %v636 = vsel %vm538, %v493, 0
        %638 = vmatpush.bf16.msra.mxu0 0
        %639 = vmatpush.bf16.msra.mxu0 0
        %640 = vmatpush.bf16.msra.mxu0 0
        %641 = vmatpush.bf16.msra.mxu0 0
        %642 = vmatpush.bf16.msra.mxu0 0
        %643 = vmatpush.bf16.msra.mxu0 0
        %644 = vmatpush.bf16.msra.mxu0 0
        %645 = vmatpush.bf16.msra.mxu0 %v636
        %646 = vmatmul.bf16.gmra.mxu0 %v633
        %v647 = vpop.f32.mrf.mxu0
        %v648 = vadd.f32 %v629, %v647
        %v649 = vpop.f32.mrf.mxu0
        %650 = vdwg.mxu0
        %651 = vrot.lane.b32.xlu0 %v497, 112
        %v652 = vpop.permute.xlu0 %651
        %653 = vrot.lane.b32.xlu0 %v497, 80
        %v654 = vpop.permute.xlu0 %653
        %v656 = vsel %vm501, %v652, 0
        %v659 = vsel %vm501, %v654, 0
        %661 = vmatpush.bf16.xpose.msra.mxu0 0
        %662 = vmatpush.bf16.xpose.msra.mxu0 0
        %663 = vmatpush.bf16.xpose.msra.mxu0 0
        %664 = vmatpush.bf16.xpose.msra.mxu0 0
        %665 = vmatpush.bf16.xpose.msra.mxu0 0
        %666 = vmatpush.bf16.xpose.msra.mxu0 0
        %667 = vmatpush.bf16.xpose.msra.mxu0 0
        %668 = vmatpush.bf16.xpose.msra.mxu0 %v659
        %669 = vmatmul.bf16.gmra.mxu0 %v656
        %v670 = vpop.f32.mrf.mxu0
        %v671 = vadd.f32 0.0, %v670
        %v672 = vpop.f32.mrf.mxu0
        %673 = vdwg.mxu0
        %v674 = vsel %vm501, %v671, -inf
        %675 = vmax.xlane.f32.xlu0 %v674
        %v676 = vpop.xlane.xlu0 %675
        %v677 = vsub.f32 %v671, %v676
        %v678 = vmul.f32 %v677, 1.442695
        %v679 = vpow.pop %v678
        %v680 = vsel %vm501, %v679, 0.0
        %681 = vadd.xlane.f32.xlu0 %v680
        %v682 = vpop.xlane.xlu0 %681
        %v683 = vrcp.pop %v682
        %v684 = vmul.f32 %v679, %v683
        %v685 = vpack.c.bf16 %v684, %v684
        %686 = vrot.lane.b32.xlu0 %v497, 48
        %v687 = vpop.permute.xlu0 %686
        %v689 = vsel %vm501, %v685, 0
        %v692 = vsel %vm538, %v687, 0
        %694 = vmatpush.bf16.msra.mxu0 0
        %695 = vmatpush.bf16.msra.mxu0 0
        %696 = vmatpush.bf16.msra.mxu0 0
        %697 = vmatpush.bf16.msra.mxu0 0
        %698 = vmatpush.bf16.msra.mxu0 0
        %699 = vmatpush.bf16.msra.mxu0 0
        %700 = vmatpush.bf16.msra.mxu0 0
        %701 = vmatpush.bf16.msra.mxu0 %v692
        %702 = vmatmul.bf16.gmra.mxu0 %v689
        %v703 = vpop.f32.mrf.mxu0
        %v704 = vadd.f32 0.0, %v703
        %v705 = vpop.f32.mrf.mxu0
        %706 = vdwg.mxu0
        %v707 = vpack.c.bf16 %v704, %v704
        %v709 = vsel %vm501, %v707, 0
        %v712 = vsel %vm538, %v495, 0
        %714 = vmatpush.bf16.msra.mxu0 0
        %715 = vmatpush.bf16.msra.mxu0 0
        %716 = vmatpush.bf16.msra.mxu0 0
        %717 = vmatpush.bf16.msra.mxu0 0
        %718 = vmatpush.bf16.msra.mxu0 0
        %719 = vmatpush.bf16.msra.mxu0 0
        %720 = vmatpush.bf16.msra.mxu0 0
        %721 = vmatpush.bf16.msra.mxu0 %v712
        %722 = vmatmul.bf16.gmra.mxu0 %v709
        %v723 = vpop.f32.mrf.mxu0
        %v724 = vadd.f32 0.0, %v723
        %v725 = vpop.f32.mrf.mxu0
        %726 = vdwg.mxu0
        %v727 = vadd.f32 %v648, %v724
        %728 = vrot.lane.b32.xlu0 %v497, 104
        %v729 = vpop.permute.xlu0 %728
        %730 = vrot.lane.b32.xlu0 %v497, 72
        %v731 = vpop.permute.xlu0 %730
        %v733 = vsel %vm501, %v729, 0
        %v736 = vsel %vm501, %v731, 0
        %738 = vmatpush.bf16.xpose.msra.mxu0 0
        %739 = vmatpush.bf16.xpose.msra.mxu0 0
        %740 = vmatpush.bf16.xpose.msra.mxu0 0
        %741 = vmatpush.bf16.xpose.msra.mxu0 0
        %742 = vmatpush.bf16.xpose.msra.mxu0 0
        %743 = vmatpush.bf16.xpose.msra.mxu0 0
        %744 = vmatpush.bf16.xpose.msra.mxu0 0
        %745 = vmatpush.bf16.xpose.msra.mxu0 %v736
        %746 = vmatmul.bf16.gmra.mxu0 %v733
        %v747 = vpop.f32.mrf.mxu0
        %v748 = vadd.f32 0.0, %v747
        %v749 = vpop.f32.mrf.mxu0
        %750 = vdwg.mxu0
        %v751 = vsel %vm501, %v748, -inf
        %752 = vmax.xlane.f32.xlu0 %v751
        %v753 = vpop.xlane.xlu0 %752
        %v754 = vsub.f32 %v748, %v753
        %v755 = vmul.f32 %v754, 1.442695
        %v756 = vpow.pop %v755
        %v757 = vsel %vm501, %v756, 0.0
        %758 = vadd.xlane.f32.xlu0 %v757
        %v759 = vpop.xlane.xlu0 %758
        %v760 = vrcp.pop %v759
        %v761 = vmul.f32 %v756, %v760
        %v762 = vpack.c.bf16 %v761, %v761
        %763 = vrot.lane.b32.xlu0 %v497, 40
        %v764 = vpop.permute.xlu0 %763
        %v766 = vsel %vm501, %v762, 0
        %v769 = vsel %vm538, %v764, 0
        %771 = vmatpush.bf16.msra.mxu0 0
        %772 = vmatpush.bf16.msra.mxu0 0
        %773 = vmatpush.bf16.msra.mxu0 0
        %774 = vmatpush.bf16.msra.mxu0 0
        %775 = vmatpush.bf16.msra.mxu0 0
        %776 = vmatpush.bf16.msra.mxu0 0
        %777 = vmatpush.bf16.msra.mxu0 0
        %778 = vmatpush.bf16.msra.mxu0 %v769
        %779 = vmatmul.bf16.gmra.mxu0 %v766
        %v780 = vpop.f32.mrf.mxu0
        %v781 = vadd.f32 0.0, %v780
        %v782 = vpop.f32.mrf.mxu0
        %783 = vdwg.mxu0
        %v784 = vpack.c.bf16 %v781, %v781
        %v786 = vsel %vm501, %v784, 0
        %v789 = vsel %vm538, %v496, 0
        %791 = vmatpush.bf16.msra.mxu0 0
        %792 = vmatpush.bf16.msra.mxu0 0
        %793 = vmatpush.bf16.msra.mxu0 0
        %794 = vmatpush.bf16.msra.mxu0 0
        %795 = vmatpush.bf16.msra.mxu0 0
        %796 = vmatpush.bf16.msra.mxu0 0
        %797 = vmatpush.bf16.msra.mxu0 0
        %798 = vmatpush.bf16.msra.mxu0 %v789
        %799 = vmatmul.bf16.gmra.mxu0 %v786
        %v800 = vpop.f32.mrf.mxu0
        %v801 = vadd.f32 0.0, %v800
        %v802 = vpop.f32.mrf.mxu0
        %803 = vdwg.mxu0
        %v804 = vadd.f32 %v727, %v801
        %v805 = vld [vmem:[%s4] sm:$0x1]
        %v807 = vperm.slane %v805, 0
        %v809 = vadd.f32 %v804, %v807
        %v810 = vadd.f32 %v454, %v809
        %v811 = vld [vmem:[%s5] sm:$0x1]
        %v812 = vld [vmem:[%s6] sm:$0x1]
        %v813 = vsel %vm476, %v810, 0.0
        %814 = vadd.xlane.f32.xlu0 %v813
        %v815 = vpop.xlane.xlu0 %814
        %v816 = vrcp.pop 32.0
        %v817 = vmul.f32 32.0, %v816
        %v818 = vsub.f32 1.0, %v817
        %v819 = vmul.f32 %v816, %v818
        %v820 = vadd.f32 %v816, %v819
        %vm821 = vweird.f32 %v816
        %v822 = vsel %vm821, %v816, %v820
        %v823 = vmul.f32 %v815, %v822
        %v824 = vsub.f32 %v810, %v823
        %v825 = vmul.f32 %v824, %v824
        %v826 = vsel %vm476, %v825, 0.0
        %827 = vadd.xlane.f32.xlu0 %v826
        %v828 = vpop.xlane.xlu0 %827
        %v829 = vmul.f32 %v828, %v822
        %v830 = vadd.f32 %v829, 1e-05
        %v831 = vrsqrt.pop %v830
        %v832 = vmul.f32 %v831, %v830
        %v833 = vmul.f32 %v832, %v831
        %v834 = vmul.f32 0.5, %v833
        %v835 = vsub.f32 1.5, %v834
        %v836 = vmul.f32 %v831, %v835
        %vm837 = vweird.f32 %v830
        %vm838 = vweird.f32 %v831
        %vm839 = vmor %vm837, %vm838
        %v840 = vsel %vm839, %v831, %v836
        %v841 = vmul.f32 %v824, %v840
        %v843 = vperm.slane %v811, 0
        %v845 = vmul.f32 %v841, %v843
        %v847 = vperm.slane %v812, 0
        %v849 = vadd.f32 %v845, %v847
        %v850 = vpack.c.bf16 %v849, %v849
        %v851 = vld [vmem:[#allocation2] sm:$0xf]
        %v852 = vld [vmem:[#allocation2 + $0x4] sm:$0xf]
        %v853 = vld [vmem:[#allocation2 + $0x8] sm:$0xf]
        %v854 = vld [vmem:[#allocation2 + $0xc] sm:$0xf]
        %v855 = vld [vmem:[%s8] sm:$0x1]
        %v857 = vperm.slane %v855, 0
        %v863 = vunpack.c.l.b16 %v851
        %v864 = vunpack.c.l.b16 %v852
        %v865 = vunpack.c.l.b16 %v853
        %v866 = vunpack.c.l.b16 %v854
        %v867 = vpack.c.b16 %v864, %v863
        %v868 = vpack.c.b16 %v866, %v865
        %v872 = vsel %vm476, %v850, 0
        %874 = vmatpush.bf16.msra.mxu0 0
        %875 = vmatpush.bf16.msra.mxu0 0
        %876 = vmatpush.bf16.msra.mxu0 0
        %877 = vmatpush.bf16.msra.mxu0 0
        %878 = vmatpush.bf16.msra.mxu0 0
        %879 = vmatpush.bf16.msra.mxu0 0
        %880 = vmatpush.bf16.msra.mxu0 %v868
        %881 = vmatpush.bf16.msra.mxu0 %v867
        %882 = vmatmul.bf16.gmra.mxu0 %v872
        %v883 = vpop.f32.mrf.mxu0
        %v884 = vadd.f32 %v857, %v883
        %v885 = vpop.f32.mrf.mxu0
        %886 = vdwg.mxu0
        %v887 = vmax.f32 %v884, 0.0
        %v888 = vpack.c.bf16 %v887, %v887
        %v889 = vld [vmem:[%s9] sm:$0xf]
        %v890 = vld [vmem:[%s9 + $0x4] sm:$0xf]
        %v891 = vld [vmem:[%s9 + $0x8] sm:$0xf]
        %v892 = vld [vmem:[%s9 + $0xc] sm:$0xf]
        %v893 = vld [vmem:[%s9 + $0x10] sm:$0xf]
        %v894 = vld [vmem:[%s9 + $0x14] sm:$0xf]
        %v895 = vld [vmem:[%s9 + $0x18] sm:$0xf]
        %v896 = vld [vmem:[%s9 + $0x1c] sm:$0xf]
        %v897 = vld [vmem:[%s10] sm:$0x1]
        %v899 = vperm.slane %v897, 0
        %v909 = vunpack.c.l.b16 %v889
        %v910 = vunpack.c.l.b16 %v890
        %v911 = vunpack.c.l.b16 %v891
        %v912 = vunpack.c.l.b16 %v892
        %v913 = vunpack.c.l.b16 %v893
        %v914 = vunpack.c.l.b16 %v894
        %v915 = vunpack.c.l.b16 %v895
        %v916 = vunpack.c.l.b16 %v896
        %v917 = vpack.c.b16 %v910, %v909
        %v918 = vpack.c.b16 %v912, %v911
        %v919 = vpack.c.b16 %v914, %v913
        %v920 = vpack.c.b16 %v916, %v915
        %vm925 = vcmask 523264
        %v927 = vsel %vm925, %v888, 0
        %929 = vmatpush.bf16.msra.mxu0 0
        %930 = vmatpush.bf16.msra.mxu0 0
        %931 = vmatpush.bf16.msra.mxu0 0
        %932 = vmatpush.bf16.msra.mxu0 0
        %933 = vmatpush.bf16.msra.mxu0 %v920
        %934 = vmatpush.bf16.msra.mxu0 %v919
        %935 = vmatpush.bf16.msra.mxu0 %v918
        %936 = vmatpush.bf16.msra.mxu0 %v917
        %937 = vmatmul.bf16.gmra.mxu0 %v927
        %v938 = vpop.f32.mrf.mxu0
        %v939 = vadd.f32 %v899, %v938
        %v940 = vpop.f32.mrf.mxu0
        %941 = vdwg.mxu0
        %v942 = vadd.f32 %v849, %v939
        %v943 = vld [vmem:[%s11] sm:$0x1]
        %v944 = vld [vmem:[%s12] sm:$0x1]
        %v945 = vsel %vm476, %v942, 0.0
        %946 = vadd.xlane.f32.xlu0 %v945
        %v947 = vpop.xlane.xlu0 %946
        %v948 = vmul.f32 %v947, %v822
        %v949 = vsub.f32 %v942, %v948
        %v950 = vmul.f32 %v949, %v949
        %v951 = vsel %vm476, %v950, 0.0
        %952 = vadd.xlane.f32.xlu0 %v951
        %v953 = vpop.xlane.xlu0 %952
        %v954 = vmul.f32 %v953, %v822
        %v955 = vadd.f32 %v954, 1e-05
        %v956 = vrsqrt.pop %v955
        %v957 = vmul.f32 %v956, %v955
        %v958 = vmul.f32 %v957, %v956
        %v959 = vmul.f32 0.5, %v958
        %v960 = vsub.f32 1.5, %v959
        %v961 = vmul.f32 %v956, %v960
        %vm962 = vweird.f32 %v955
        %vm963 = vweird.f32 %v956
        %vm964 = vmor %vm962, %vm963
        %v965 = vsel %vm964, %v956, %v961
        %v966 = vmul.f32 %v949, %v965
        %v968 = vperm.slane %v943, 0
        %v970 = vmul.f32 %v966, %v968
        %v972 = vperm.slane %v944, 0
        %v974 = vadd.f32 %v970, %v972
        %975 = vst.msk [vmem:[%s448] sm:$0xff] %vm476, %v974
        %s976 = sand.u32 %s314, 1
        %s977 = scalar_lea.sflag [#allocation4], %s976
        %s978 = sand.u32 %s314, 1
        %s979 = smul.addr %s978, 8
        %s980 = scalar_lea.vmem [#allocation5], %s979
        // Predicated region
        $region77: #{tpu_custom_call.1} parent=71 // pred_check
          %p981 = pneg %p324
        $region78: #{tpu_custom_call.1} parent=71 // pred_check_branch
          %983 = sbr.rel (%p981) target = $region80
        $region79: #{tpu_custom_call.1} parent=71 // pred_region
          %985 = vsyncadd %s977, 0
          %s986 = smul.addr %s28, 8
          %s987 = scalar_lea.hbm %s13, %s986
          %s989 = sshll.u32 %s980, 4
          %s990 = int_to_ptr.vmem [resolvable:$true] %s989
          %s991 = sshll.u32 %s987, 4
          %s992 = int_to_ptr.hbm [resolvable:$true] %s991
          %994 = dma.vmem_to_hbm [thread:$0]  %s990, 128, %s992, %s977
        $region80: #{tpu_custom_call.1} parent=71 // pred_fallthru
          _
      $region72: #{tpu_custom_call.1} parent=5 // pred_fallthru
        _
      %p995 = scmp.le.s32.totalorder 2, %s23
      // Predicated region
      $region81: #{tpu_custom_call.1} parent=5 // pred_check
        %p996 = pneg %p995
      $region82: #{tpu_custom_call.1} parent=5 // pred_check_branch
        %998 = sbr.rel (%p996) target = $region84
      $region83: #{tpu_custom_call.1} parent=5 // pred_region
        %s999 = ssub.s32 %s23, 2
        // Predicated region
        $region85: #{tpu_custom_call.1} parent=83 // pred_check
          %p1000 = pneg %p330
        $region86: #{tpu_custom_call.1} parent=83 // pred_check_branch
          %1002 = sbr.rel (%p1000) target = $region88
        $region87: #{tpu_custom_call.1} parent=83 // pred_region
          %s1003 = sand.u32 %s315, 1
          %s1004 = scalar_lea.sflag [#allocation4], %s1003
          %s1005 = sand.u32 %s315, 1
          %s1006 = smul.addr %s1005, 8
          %s1007 = scalar_lea.vmem [#allocation5], %s1006
          %1009 = dma.done %s1004, 128
        $region88: #{tpu_custom_call.1} parent=83 // pred_fallthru
          _
      $region84: #{tpu_custom_call.1} parent=5 // pred_fallthru
        _
    $region6: #{tpu_custom_call.1} parent=1 // loop_footer
      %s27 = sadd.s32 1, %s23
    $region7: #{tpu_custom_call.1} parent=1 // loop_footer_branch
      %22 = sbr.rel target = $region3
    $region8: #{tpu_custom_call.1} parent=1 // loop_exit
      _
    %1010 = vsyncpa [#allocation3], 1
    %s1011 = scalar_lea.sflag [#allocation3], 1
    %1012 = vsyncpa %s1011, 1
    %1013 = vsyncpa [#allocation4], 1
    %s1014 = scalar_lea.sflag [#allocation4], 1
    %1015 = vsyncpa %s1014, 1

</llo_original>
